<compile_context>
chip_gen: v6e
topology: v6e:2x2x1
jax: 0.10.0
libtpu: 0.0.40
codegen_flags: <defaults>
</compile_context>

<pallas_src>
import jax
import jax.numpy as jnp
from jax import lax
from jax.experimental import pallas as pl
from jax.experimental.pallas import tpu as pltpu

# ----------------------------- config ---------------------------------------
B = 2            # batch
S = 8            # sequence length
AUG_D = 16       # augmenting_model.config.hidden_size
ANC_D = 32       # anchor_model.config.hidden_size
N_HEADS = 4      # anchor_model.config.num_attention_heads
HEAD_D = ANC_D // N_HEADS
VOCAB = 64       # anchor lm_head vocab size
N_STUB_LAYERS = 3              # stub backbone depth -> hidden_states has 4 entries
ANCHOR_LAYERS = (1, 3)         # self.anchor_layers
AUG_LAYERS = (1, 3)            # self.augmenting_layers

LANE_W = 2 * ANC_D             # slab lane width (== VOCAB here)
assert LANE_W == VOCAB

# bf16 weight-slab row layout.  Weight blocks start at multiples of 16
# (bf16 sublane-pair packing); every bias row gets its own 8-row-aligned block.
R_WQ = 0                     # rows [0, 32):   Wq * 1/sqrt(dh)  (cols 0:E, rest zero-pad)
R_KV = R_WQ + ANC_D          # rows [32, 48):  Wkv = Wp @ [Wk | Wv]        (Dg, 2E)
R_LM = R_KV + AUG_D          # rows [48, 80):  lm_head weight               (E, V)
R_OV = R_LM + ANC_D          # rows [80, 112): W_ov = Wo @ W_lm             (E, V)
R_BQ = R_OV + ANC_D          # row 112:        bq * 1/sqrt(dh)   (cols 0:E)
R_BKV = R_BQ + 8             # row 120:        bp @ [Wk|Wv] + [bk|bv]       (1, 2E)
R_BLM = R_BKV + 8            # row 128:        bo @ W_lm                    (1, V)
R_TOT = R_BLM + 8            # 136


# ---------------- Pallas kernel: composition layer + lm_head (fused) ---------
# q        = anchor @ (Wq*scale) + bq*scale
# k | v    = aug @ (Wp @ [Wk|Wv]) + (bp @ [Wk|Wv] + [bk|bv])   (projection folded)
# logits   = anchor @ W_lm + b_lm + sum_h softmax(q_h k_h^T) v_h @ (Wo @ W_lm)_h
def fused_composition_lm_head_kernel(anchor_ref, aug_ref, w_ref, out_ref):
    f32, bf16 = jnp.float32, jnp.bfloat16

    anchor = anchor_ref[...]                               # (B*S, E)   bf16
    aug = aug_ref[...]                                     # (B*S, Dg)  bf16

    # static slab slices — weights are already bf16 (no in-kernel casts)
    wq = w_ref[R_WQ:R_WQ + ANC_D, 0:ANC_D]                 # (E, E)  scale folded
    wkv = w_ref[R_KV:R_KV + AUG_D, :]                      # (Dg, 2E)
    wlm = w_ref[R_LM:R_LM + ANC_D, :]                      # (E, V)
    wov = w_ref[R_OV:R_OV + ANC_D, :]                      # (E, V)  = Wo @ W_lm
    bq = w_ref[R_BQ:R_BQ + 1, 0:ANC_D].astype(f32)         # (1, E)
    bkv = w_ref[R_BKV:R_BKV + 1, :].astype(f32)            # (1, 2E)
    blm = w_ref[R_BLM:R_BLM + 1, :].astype(f32)            # (1, V)

    # whole-tensor projections: one matmul each, f32 accumulation, then a
    # single whole-array bf16 cast for the attention operands
    q = (jnp.dot(anchor, wq, preferred_element_type=f32) + bq).astype(bf16)    # (BS, E)
    kv = (jnp.dot(aug, wkv, preferred_element_type=f32) + bkv).astype(bf16)    # (BS, 2E)
    # residual path through the folded lm_head, once for all B*S rows
    base = jnp.dot(anchor, wlm, preferred_element_type=f32) + blm              # (BS, V)

    # attention is per batch element (no cross-batch mixing); B and heads are
    # tiny, so static unroll
    for b in range(B):
        r0, r1 = b * S, (b + 1) * S
        qb = q[r0:r1]                                      # (S, E)   bf16
        kvb = kv[r0:r1]                                    # (S, 2E)  bf16
        logits_b = base[r0:r1]                             # (S, V)   f32
        for h in range(N_HEADS):
            c0, c1 = h * HEAD_D, (h + 1) * HEAD_D
            qh = qb[:, c0:c1]                              # (S, dh)
            kh = kvb[:, c0:c1]                             # (S, dh)
            vh = kvb[:, ANC_D + c0:ANC_D + c1]             # (S, dh)
            # contraction on the last dims of both operands — no transpose
            s_bh = lax.dot_general(qh, kh, (((1,), (1,)), ((), ())),
                                   preferred_element_type=f32)           # (S, S)
            s_bh = s_bh - jnp.max(s_bh, axis=-1, keepdims=True)
            p = jnp.exp(s_bh)
            p = p * pl.reciprocal(jnp.sum(p, axis=-1, keepdims=True), approx=True)
            o_h = jnp.dot(p.astype(bf16), vh, preferred_element_type=f32)  # (S, dh)
            # out_proj folded into lm_head: per-head o_h @ (Wo @ W_lm)[rows c0:c1]
            logits_b = logits_b + jnp.dot(o_h.astype(bf16), wov[c0:c1, :],
                                          preferred_element_type=f32)
        out_ref[r0:r1, :] = logits_b


_COST = pl.CostEstimate(
    flops=(2 * B * S * (ANC_D * ANC_D + AUG_D * 2 * ANC_D + ANC_D * VOCAB)
           + 2 * B * N_HEADS * (2 * S * S * HEAD_D + S * HEAD_D * VOCAB)),
    transcendentals=B * N_HEADS * S * (S + 1),
    bytes_accessed=(2 * B * S * (ANC_D + AUG_D) + 2 * R_TOT * LANE_W
                    + 4 * B * S * VOCAB),
)


def fused_composition_lm_head(anchor_h, aug_h, w_slab):
    """anchor_h: (B,S,ANC_D), aug_h: (B,S,AUG_D) -> logits (B,S,VOCAB) float32."""
    # After the Wo->lm_head fold, anchor only feeds the MXU, so both activations
    # can be pre-cast to bf16 here (fused into the backbone epilogue under jit).
    anchor2d = anchor_h.reshape(B * S, ANC_D).astype(jnp.bfloat16)
    aug2d = aug_h.reshape(B * S, AUG_D).astype(jnp.bfloat16)
    logits2d = pl.pallas_call(
        fused_composition_lm_head_kernel,
        out_shape=jax.ShapeDtypeStruct((B * S, VOCAB), jnp.float32),
        in_specs=[pl.BlockSpec(memory_space=pltpu.MemorySpace.VMEM)] * 3,
        out_specs=pl.BlockSpec(memory_space=pltpu.MemorySpace.VMEM),
        cost_estimate=_COST,
    )(anchor2d, aug2d, w_slab)
    return logits2d.reshape(B, S, VOCAB)


# --------------------- host-side exact weight folding ------------------------
def fold_composition_params(layer, lm_w_t):
    """Exact folds: projection into K/V, 1/sqrt(dh) into Q, out_proj (+bias)
    into lm_head; pack everything (weights + biases) into one bf16 slab."""
    wp, bp, wq, bq, wk, bk, wv, bv, wo, bo = layer
    scale = 1.0 / (HEAD_D ** 0.5)
    f32 = jnp.float32
    zeros = lambda r, c: jnp.zeros((r, c), f32)

    wkv_raw = jnp.concatenate([wk, wv], axis=1)               # (E, 2E)
    bkv_raw = jnp.concatenate([bk, bv], axis=1)               # (1, 2E)
    wkv = wp @ wkv_raw                                        # (Dg, 2E)  exact fold
    bkv = bp @ wkv_raw + bkv_raw                              # (1, 2E)
    w_ov = wo @ lm_w_t                                        # (E, V)    Wo folded into lm_head
    b_lm = bo @ lm_w_t                                        # (1, V)

    slab = jnp.concatenate([
        jnp.concatenate([wq * scale, zeros(ANC_D, LANE_W - ANC_D)], axis=1),  # [0, 32)
        wkv,                                                                  # [32, 48)
        lm_w_t,                                                               # [48, 80)
        w_ov,                                                                 # [80, 112)
        jnp.concatenate([bq * scale, zeros(1, LANE_W - ANC_D)], axis=1),      # row 112
        zeros(7, LANE_W),
        bkv,                                                                  # row 120
        zeros(7, LANE_W),
        b_lm,                                                                 # row 128
        zeros(7, LANE_W),
    ], axis=0).astype(jnp.bfloat16)                                           # (R_TOT, LANE_W)
    assert slab.shape == (R_TOT, LANE_W)
    return slab


# ----------------------- stub backbones (plain JAX glue) ---------------------
# TODO(synk): pretrained anchor/augmenting transformer backbones are external
# checkpoints with no clean Pallas equivalent here; replaced by a deterministic
# embedding + tanh-MLP stub that yields an output_hidden_states-style list.
def stub_backbone(input_ids, embed_table, layer_ws):
    h = embed_table[input_ids]                    # (B, S, D)
    hidden_states = [h]
    for w in layer_ws:
        h = jnp.tanh(h @ w)
        hidden_states.append(h)
    return hidden_states


# ------------------------------ model wrapper --------------------------------
def composition_model_forward(input_ids, params):
    anchor_hs = stub_backbone(input_ids, params["anchor_embed"], params["anchor_layers_w"])
    aug_hs = stub_backbone(input_ids, params["aug_embed"], params["aug_layers_w"])

    # In the reference forward only anchor_hidden_states[-1] (last selected
    # layer, after composition) feeds lm_head; with precomputed hidden states
    # the earlier composed layers are never consumed, so that dead
    # cross-attention compute is skipped (logits unchanged).
    # TODO(synk): with a real CALM backbone, earlier composed states would be
    # re-injected into subsequent anchor blocks and could not be skipped.
    last = len(ANCHOR_LAYERS) - 1
    anchor_h = anchor_hs[ANCHOR_LAYERS[last]]
    aug_h = aug_hs[AUG_LAYERS[last]]

    w_slab = fold_composition_params(params["compose"][last], params["lm_head_w_t"])
    return fused_composition_lm_head(anchor_h, aug_h, w_slab)


# ------------------------------- param init ----------------------------------
def init_params(key):
    keys = iter(jax.random.split(key, 64))
    nk = lambda: next(keys)
    p = {
        "anchor_embed": 0.1 * jax.random.normal(nk(), (VOCAB, ANC_D), jnp.float32),
        "aug_embed": 0.1 * jax.random.normal(nk(), (VOCAB, AUG_D), jnp.float32),
        "anchor_layers_w": [0.1 * jax.random.normal(nk(), (ANC_D, ANC_D), jnp.float32)
                            for _ in range(N_STUB_LAYERS)],
        "aug_layers_w": [0.1 * jax.random.normal(nk(), (AUG_D, AUG_D), jnp.float32)
                         for _ in range(N_STUB_LAYERS)],
        # lm_head: Linear(ANC_D -> VOCAB, bias=False); stored pre-transposed (in, out)
        "lm_head_w_t": 0.1 * jax.random.normal(nk(), (ANC_D, VOCAB), jnp.float32),
        "compose": [],
    }
    for _ in range(len(ANCHOR_LAYERS)):
        # all Linear weights stored pre-transposed as (in, out); biases as (1, out)
        layer = (
            0.1 * jax.random.normal(nk(), (AUG_D, ANC_D), jnp.float32),  # Wp
            0.1 * jax.random.normal(nk(), (1, ANC_D), jnp.float32),      # bp
            0.1 * jax.random.normal(nk(), (ANC_D, ANC_D), jnp.float32),  # Wq
            0.1 * jax.random.normal(nk(), (1, ANC_D), jnp.float32),      # bq
            0.1 * jax.random.normal(nk(), (ANC_D, ANC_D), jnp.float32),  # Wk
            0.1 * jax.random.normal(nk(), (1, ANC_D), jnp.float32),      # bk
            0.1 * jax.random.normal(nk(), (ANC_D, ANC_D), jnp.float32),  # Wv
            0.1 * jax.random.normal(nk(), (1, ANC_D), jnp.float32),      # bv
            0.1 * jax.random.normal(nk(), (ANC_D, ANC_D), jnp.float32),  # Wo
            0.1 * jax.random.normal(nk(), (1, ANC_D), jnp.float32),      # bo
        )
        p["compose"].append(layer)
    return p


if __name__ == "__main__":
    key = jax.random.PRNGKey(0)
    k_params, k_ids = jax.random.split(key)
    params = init_params(k_params)
    input_ids = jax.random.randint(k_ids, (B, S), 0, VOCAB, dtype=jnp.int32)

    # params closed over as constants -> weight folding / slab packing is
    # constant-folded at compile time instead of re-executed per call.
    forward = jax.jit(lambda ids: composition_model_forward(ids, params))

    logits = jax.block_until_ready(forward(input_ids))

    assert logits.shape == (B, S, VOCAB), logits.shape
    assert logits.dtype == jnp.float32, logits.dtype
    assert bool(jnp.all(jnp.isfinite(logits)))
    print("KERNEL_OK")
</pallas_src>

<mosaic_0001>
module attributes {stable_mosaic.version = 11 : i64} {
  func.func @fused_composition_lm_head_kernel(%arg0: memref<16x32xbf16, #tpu.memory_space<vmem>>, %arg1: memref<16x16xbf16, #tpu.memory_space<vmem>>, %arg2: memref<136x64xbf16, #tpu.memory_space<vmem>>, %arg3: memref<16x64xf32, #tpu.memory_space<vmem>>) attributes {dimension_semantics = [], scalar_prefetch = 0 : i64, scratch_operands = 0 : i64, tpu.core_type = #tpu.core_type<tc>} {
    %c0 = arith.constant 0 : index
    %c0_0 = arith.constant 0 : index
    %0 = vector.load %arg0[%c0, %c0_0] : memref<16x32xbf16, #tpu.memory_space<vmem>>, vector<16x32xbf16>
    %c0_1 = arith.constant 0 : index
    %c0_2 = arith.constant 0 : index
    %1 = vector.load %arg1[%c0_1, %c0_2] : memref<16x16xbf16, #tpu.memory_space<vmem>>, vector<16x16xbf16>
    %c0_3 = arith.constant 0 : index
    %c0_4 = arith.constant 0 : index
    %2 = vector.load %arg2[%c0_3, %c0_4] : memref<136x64xbf16, #tpu.memory_space<vmem>>, vector<32x32xbf16>
    %c32 = arith.constant 32 : index
    %c0_5 = arith.constant 0 : index
    %3 = vector.load %arg2[%c32, %c0_5] : memref<136x64xbf16, #tpu.memory_space<vmem>>, vector<16x64xbf16>
    %c48 = arith.constant 48 : index
    %c0_6 = arith.constant 0 : index
    %4 = vector.load %arg2[%c48, %c0_6] : memref<136x64xbf16, #tpu.memory_space<vmem>>, vector<32x64xbf16>
    %c80 = arith.constant 80 : index
    %c0_7 = arith.constant 0 : index
    %5 = vector.load %arg2[%c80, %c0_7] : memref<136x64xbf16, #tpu.memory_space<vmem>>, vector<32x64xbf16>
    %c112 = arith.constant 112 : index
    %c0_8 = arith.constant 0 : index
    %6 = vector.load %arg2[%c112, %c0_8] : memref<136x64xbf16, #tpu.memory_space<vmem>>, vector<1x32xbf16>
    %7 = arith.extf %6 : vector<1x32xbf16> to vector<1x32xf32>
    %c120 = arith.constant 120 : index
    %c0_9 = arith.constant 0 : index
    %8 = vector.load %arg2[%c120, %c0_9] : memref<136x64xbf16, #tpu.memory_space<vmem>>, vector<1x64xbf16>
    %9 = arith.extf %8 : vector<1x64xbf16> to vector<1x64xf32>
    %c128 = arith.constant 128 : index
    %c0_10 = arith.constant 0 : index
    %10 = vector.load %arg2[%c128, %c0_10] : memref<136x64xbf16, #tpu.memory_space<vmem>>, vector<1x64xbf16>
    %11 = arith.extf %10 : vector<1x64xbf16> to vector<1x64xf32>
    %cst = arith.constant dense<0.000000e+00> : vector<16x32xf32>
    %12 = tpu.matmul %0, %2, %cst {dimension_numbers = #tpu.dot_dimension_numbers<[1], [0], [0], [1], [0, 0, 1, 1], [], []>} : vector<16x32xbf16>, vector<32x32xbf16>, vector<16x32xf32> -> vector<16x32xf32>
    %13 = vector.broadcast %7 : vector<1x32xf32> to vector<16x32xf32>
    %14 = arith.addf %12, %13 : vector<16x32xf32>
    %15 = arith.truncf %14 : vector<16x32xf32> to vector<16x32xbf16>
    %cst_11 = arith.constant dense<0.000000e+00> : vector<16x64xf32>
    %16 = tpu.matmul %1, %3, %cst_11 {dimension_numbers = #tpu.dot_dimension_numbers<[1], [0], [0], [1], [0, 0, 1, 1], [], []>} : vector<16x16xbf16>, vector<16x64xbf16>, vector<16x64xf32> -> vector<16x64xf32>
    %17 = vector.broadcast %9 : vector<1x64xf32> to vector<16x64xf32>
    %18 = arith.addf %16, %17 : vector<16x64xf32>
    %19 = arith.truncf %18 : vector<16x64xf32> to vector<16x64xbf16>
    %cst_12 = arith.constant dense<0.000000e+00> : vector<16x64xf32>
    %20 = tpu.matmul %0, %4, %cst_12 {dimension_numbers = #tpu.dot_dimension_numbers<[1], [0], [0], [1], [0, 0, 1, 1], [], []>} : vector<16x32xbf16>, vector<32x64xbf16>, vector<16x64xf32> -> vector<16x64xf32>
    %21 = vector.broadcast %11 : vector<1x64xf32> to vector<16x64xf32>
    %22 = arith.addf %20, %21 : vector<16x64xf32>
    %23 = vector.extract_strided_slice %15 {offsets = [0, 0], sizes = [8, 32], strides = [1, 1]} : vector<16x32xbf16> to vector<8x32xbf16>
    %24 = vector.extract_strided_slice %19 {offsets = [0, 0], sizes = [8, 64], strides = [1, 1]} : vector<16x64xbf16> to vector<8x64xbf16>
    %25 = vector.extract_strided_slice %22 {offsets = [0, 0], sizes = [8, 64], strides = [1, 1]} : vector<16x64xf32> to vector<8x64xf32>
    %26 = vector.extract_strided_slice %23 {offsets = [0, 0], sizes = [8, 8], strides = [1, 1]} : vector<8x32xbf16> to vector<8x8xbf16>
    %27 = vector.extract_strided_slice %24 {offsets = [0, 0], sizes = [8, 8], strides = [1, 1]} : vector<8x64xbf16> to vector<8x8xbf16>
    %28 = vector.extract_strided_slice %24 {offsets = [0, 32], sizes = [8, 8], strides = [1, 1]} : vector<8x64xbf16> to vector<8x8xbf16>
    %cst_13 = arith.constant dense<0.000000e+00> : vector<8x8xf32>
    %29 = tpu.matmul %26, %27, %cst_13 {dimension_numbers = #tpu.dot_dimension_numbers<[1], [1], [0], [0], [0, 0, 1, 0], [], []>} : vector<8x8xbf16>, vector<8x8xbf16>, vector<8x8xf32> -> vector<8x8xf32>
    %cst_14 = arith.constant dense<0xFF800000> : vector<8xf32>
    %30 = vector.multi_reduction <maximumf>, %29, %cst_14 [1] : vector<8x8xf32> to vector<8xf32>
    %31 = vector.shape_cast %30 : vector<8xf32> to vector<8x1xf32>
    %32 = vector.broadcast %31 : vector<8x1xf32> to vector<8x8xf32>
    %33 = arith.subf %29, %32 : vector<8x8xf32>
    %34 = math.exp %33 : vector<8x8xf32>
    %cst_15 = arith.constant dense<0.000000e+00> : vector<8xf32>
    %35 = vector.multi_reduction <add>, %34, %cst_15 [1] : vector<8x8xf32> to vector<8xf32>
    %36 = vector.shape_cast %35 : vector<8xf32> to vector<8x1xf32>
    %37 = tpu.reciprocal %36 {approx = true} : vector<8x1xf32> -> vector<8x1xf32>
    %38 = vector.broadcast %37 : vector<8x1xf32> to vector<8x8xf32>
    %39 = arith.mulf %34, %38 : vector<8x8xf32>
    %40 = arith.truncf %39 : vector<8x8xf32> to vector<8x8xbf16>
    %cst_16 = arith.constant dense<0.000000e+00> : vector<8x8xf32>
    %41 = tpu.matmul %40, %28, %cst_16 {dimension_numbers = #tpu.dot_dimension_numbers<[1], [0], [0], [1], [0, 0, 1, 1], [], []>} : vector<8x8xbf16>, vector<8x8xbf16>, vector<8x8xf32> -> vector<8x8xf32>
    %42 = arith.truncf %41 : vector<8x8xf32> to vector<8x8xbf16>
    %43 = vector.extract_strided_slice %5 {offsets = [0, 0], sizes = [8, 64], strides = [1, 1]} : vector<32x64xbf16> to vector<8x64xbf16>
    %cst_17 = arith.constant dense<0.000000e+00> : vector<8x64xf32>
    %44 = tpu.matmul %42, %43, %cst_17 {dimension_numbers = #tpu.dot_dimension_numbers<[1], [0], [0], [1], [0, 0, 1, 1], [], []>} : vector<8x8xbf16>, vector<8x64xbf16>, vector<8x64xf32> -> vector<8x64xf32>
    %45 = arith.addf %25, %44 : vector<8x64xf32>
    %46 = vector.extract_strided_slice %23 {offsets = [0, 8], sizes = [8, 8], strides = [1, 1]} : vector<8x32xbf16> to vector<8x8xbf16>
    %47 = vector.extract_strided_slice %24 {offsets = [0, 8], sizes = [8, 8], strides = [1, 1]} : vector<8x64xbf16> to vector<8x8xbf16>
    %48 = vector.extract_strided_slice %24 {offsets = [0, 40], sizes = [8, 8], strides = [1, 1]} : vector<8x64xbf16> to vector<8x8xbf16>
    %cst_18 = arith.constant dense<0.000000e+00> : vector<8x8xf32>
    %49 = tpu.matmul %46, %47, %cst_18 {dimension_numbers = #tpu.dot_dimension_numbers<[1], [1], [0], [0], [0, 0, 1, 0], [], []>} : vector<8x8xbf16>, vector<8x8xbf16>, vector<8x8xf32> -> vector<8x8xf32>
    %cst_19 = arith.constant dense<0xFF800000> : vector<8xf32>
    %50 = vector.multi_reduction <maximumf>, %49, %cst_19 [1] : vector<8x8xf32> to vector<8xf32>
    %51 = vector.shape_cast %50 : vector<8xf32> to vector<8x1xf32>
    %52 = vector.broadcast %51 : vector<8x1xf32> to vector<8x8xf32>
    %53 = arith.subf %49, %52 : vector<8x8xf32>
    %54 = math.exp %53 : vector<8x8xf32>
    %cst_20 = arith.constant dense<0.000000e+00> : vector<8xf32>
    %55 = vector.multi_reduction <add>, %54, %cst_20 [1] : vector<8x8xf32> to vector<8xf32>
    %56 = vector.shape_cast %55 : vector<8xf32> to vector<8x1xf32>
    %57 = tpu.reciprocal %56 {approx = true} : vector<8x1xf32> -> vector<8x1xf32>
    %58 = vector.broadcast %57 : vector<8x1xf32> to vector<8x8xf32>
    %59 = arith.mulf %54, %58 : vector<8x8xf32>
    %60 = arith.truncf %59 : vector<8x8xf32> to vector<8x8xbf16>
    %cst_21 = arith.constant dense<0.000000e+00> : vector<8x8xf32>
    %61 = tpu.matmul %60, %48, %cst_21 {dimension_numbers = #tpu.dot_dimension_numbers<[1], [0], [0], [1], [0, 0, 1, 1], [], []>} : vector<8x8xbf16>, vector<8x8xbf16>, vector<8x8xf32> -> vector<8x8xf32>
    %62 = arith.truncf %61 : vector<8x8xf32> to vector<8x8xbf16>
    %63 = vector.extract_strided_slice %5 {offsets = [8, 0], sizes = [8, 64], strides = [1, 1]} : vector<32x64xbf16> to vector<8x64xbf16>
    %cst_22 = arith.constant dense<0.000000e+00> : vector<8x64xf32>
    %64 = tpu.matmul %62, %63, %cst_22 {dimension_numbers = #tpu.dot_dimension_numbers<[1], [0], [0], [1], [0, 0, 1, 1], [], []>} : vector<8x8xbf16>, vector<8x64xbf16>, vector<8x64xf32> -> vector<8x64xf32>
    %65 = arith.addf %45, %64 : vector<8x64xf32>
    %66 = vector.extract_strided_slice %23 {offsets = [0, 16], sizes = [8, 8], strides = [1, 1]} : vector<8x32xbf16> to vector<8x8xbf16>
    %67 = vector.extract_strided_slice %24 {offsets = [0, 16], sizes = [8, 8], strides = [1, 1]} : vector<8x64xbf16> to vector<8x8xbf16>
    %68 = vector.extract_strided_slice %24 {offsets = [0, 48], sizes = [8, 8], strides = [1, 1]} : vector<8x64xbf16> to vector<8x8xbf16>
    %cst_23 = arith.constant dense<0.000000e+00> : vector<8x8xf32>
    %69 = tpu.matmul %66, %67, %cst_23 {dimension_numbers = #tpu.dot_dimension_numbers<[1], [1], [0], [0], [0, 0, 1, 0], [], []>} : vector<8x8xbf16>, vector<8x8xbf16>, vector<8x8xf32> -> vector<8x8xf32>
    %cst_24 = arith.constant dense<0xFF800000> : vector<8xf32>
    %70 = vector.multi_reduction <maximumf>, %69, %cst_24 [1] : vector<8x8xf32> to vector<8xf32>
    %71 = vector.shape_cast %70 : vector<8xf32> to vector<8x1xf32>
    %72 = vector.broadcast %71 : vector<8x1xf32> to vector<8x8xf32>
    %73 = arith.subf %69, %72 : vector<8x8xf32>
    %74 = math.exp %73 : vector<8x8xf32>
    %cst_25 = arith.constant dense<0.000000e+00> : vector<8xf32>
    %75 = vector.multi_reduction <add>, %74, %cst_25 [1] : vector<8x8xf32> to vector<8xf32>
    %76 = vector.shape_cast %75 : vector<8xf32> to vector<8x1xf32>
    %77 = tpu.reciprocal %76 {approx = true} : vector<8x1xf32> -> vector<8x1xf32>
    %78 = vector.broadcast %77 : vector<8x1xf32> to vector<8x8xf32>
    %79 = arith.mulf %74, %78 : vector<8x8xf32>
    %80 = arith.truncf %79 : vector<8x8xf32> to vector<8x8xbf16>
    %cst_26 = arith.constant dense<0.000000e+00> : vector<8x8xf32>
    %81 = tpu.matmul %80, %68, %cst_26 {dimension_numbers = #tpu.dot_dimension_numbers<[1], [0], [0], [1], [0, 0, 1, 1], [], []>} : vector<8x8xbf16>, vector<8x8xbf16>, vector<8x8xf32> -> vector<8x8xf32>
    %82 = arith.truncf %81 : vector<8x8xf32> to vector<8x8xbf16>
    %83 = vector.extract_strided_slice %5 {offsets = [16, 0], sizes = [8, 64], strides = [1, 1]} : vector<32x64xbf16> to vector<8x64xbf16>
    %cst_27 = arith.constant dense<0.000000e+00> : vector<8x64xf32>
    %84 = tpu.matmul %82, %83, %cst_27 {dimension_numbers = #tpu.dot_dimension_numbers<[1], [0], [0], [1], [0, 0, 1, 1], [], []>} : vector<8x8xbf16>, vector<8x64xbf16>, vector<8x64xf32> -> vector<8x64xf32>
    %85 = arith.addf %65, %84 : vector<8x64xf32>
    %86 = vector.extract_strided_slice %23 {offsets = [0, 24], sizes = [8, 8], strides = [1, 1]} : vector<8x32xbf16> to vector<8x8xbf16>
    %87 = vector.extract_strided_slice %24 {offsets = [0, 24], sizes = [8, 8], strides = [1, 1]} : vector<8x64xbf16> to vector<8x8xbf16>
    %88 = vector.extract_strided_slice %24 {offsets = [0, 56], sizes = [8, 8], strides = [1, 1]} : vector<8x64xbf16> to vector<8x8xbf16>
    %cst_28 = arith.constant dense<0.000000e+00> : vector<8x8xf32>
    %89 = tpu.matmul %86, %87, %cst_28 {dimension_numbers = #tpu.dot_dimension_numbers<[1], [1], [0], [0], [0, 0, 1, 0], [], []>} : vector<8x8xbf16>, vector<8x8xbf16>, vector<8x8xf32> -> vector<8x8xf32>
    %cst_29 = arith.constant dense<0xFF800000> : vector<8xf32>
    %90 = vector.multi_reduction <maximumf>, %89, %cst_29 [1] : vector<8x8xf32> to vector<8xf32>
    %91 = vector.shape_cast %90 : vector<8xf32> to vector<8x1xf32>
    %92 = vector.broadcast %91 : vector<8x1xf32> to vector<8x8xf32>
    %93 = arith.subf %89, %92 : vector<8x8xf32>
    %94 = math.exp %93 : vector<8x8xf32>
    %cst_30 = arith.constant dense<0.000000e+00> : vector<8xf32>
    %95 = vector.multi_reduction <add>, %94, %cst_30 [1] : vector<8x8xf32> to vector<8xf32>
    %96 = vector.shape_cast %95 : vector<8xf32> to vector<8x1xf32>
    %97 = tpu.reciprocal %96 {approx = true} : vector<8x1xf32> -> vector<8x1xf32>
    %98 = vector.broadcast %97 : vector<8x1xf32> to vector<8x8xf32>
    %99 = arith.mulf %94, %98 : vector<8x8xf32>
    %100 = arith.truncf %99 : vector<8x8xf32> to vector<8x8xbf16>
    %cst_31 = arith.constant dense<0.000000e+00> : vector<8x8xf32>
    %101 = tpu.matmul %100, %88, %cst_31 {dimension_numbers = #tpu.dot_dimension_numbers<[1], [0], [0], [1], [0, 0, 1, 1], [], []>} : vector<8x8xbf16>, vector<8x8xbf16>, vector<8x8xf32> -> vector<8x8xf32>
    %102 = arith.truncf %101 : vector<8x8xf32> to vector<8x8xbf16>
    %103 = vector.extract_strided_slice %5 {offsets = [24, 0], sizes = [8, 64], strides = [1, 1]} : vector<32x64xbf16> to vector<8x64xbf16>
    %cst_32 = arith.constant dense<0.000000e+00> : vector<8x64xf32>
    %104 = tpu.matmul %102, %103, %cst_32 {dimension_numbers = #tpu.dot_dimension_numbers<[1], [0], [0], [1], [0, 0, 1, 1], [], []>} : vector<8x8xbf16>, vector<8x64xbf16>, vector<8x64xf32> -> vector<8x64xf32>
    %105 = arith.addf %85, %104 : vector<8x64xf32>
    %c0_33 = arith.constant 0 : index
    %c0_34 = arith.constant 0 : index
    %106 = vector.load %arg3[%c0_33, %c0_34] : memref<16x64xf32, #tpu.memory_space<vmem>>, vector<8x64xf32>
    tpu.vector_store %arg3[%c0_33, %c0_34], %105 {strides = array<i32>} : memref<16x64xf32, #tpu.memory_space<vmem>>, vector<8x64xf32>,
    %107 = vector.extract_strided_slice %15 {offsets = [8, 0], sizes = [8, 32], strides = [1, 1]} : vector<16x32xbf16> to vector<8x32xbf16>
    %108 = vector.extract_strided_slice %19 {offsets = [8, 0], sizes = [8, 64], strides = [1, 1]} : vector<16x64xbf16> to vector<8x64xbf16>
    %109 = vector.extract_strided_slice %22 {offsets = [8, 0], sizes = [8, 64], strides = [1, 1]} : vector<16x64xf32> to vector<8x64xf32>
    %110 = vector.extract_strided_slice %107 {offsets = [0, 0], sizes = [8, 8], strides = [1, 1]} : vector<8x32xbf16> to vector<8x8xbf16>
    %111 = vector.extract_strided_slice %108 {offsets = [0, 0], sizes = [8, 8], strides = [1, 1]} : vector<8x64xbf16> to vector<8x8xbf16>
    %112 = vector.extract_strided_slice %108 {offsets = [0, 32], sizes = [8, 8], strides = [1, 1]} : vector<8x64xbf16> to vector<8x8xbf16>
    %cst_35 = arith.constant dense<0.000000e+00> : vector<8x8xf32>
    %113 = tpu.matmul %110, %111, %cst_35 {dimension_numbers = #tpu.dot_dimension_numbers<[1], [1], [0], [0], [0, 0, 1, 0], [], []>} : vector<8x8xbf16>, vector<8x8xbf16>, vector<8x8xf32> -> vector<8x8xf32>
    %cst_36 = arith.constant dense<0xFF800000> : vector<8xf32>
    %114 = vector.multi_reduction <maximumf>, %113, %cst_36 [1] : vector<8x8xf32> to vector<8xf32>
    %115 = vector.shape_cast %114 : vector<8xf32> to vector<8x1xf32>
    %116 = vector.broadcast %115 : vector<8x1xf32> to vector<8x8xf32>
    %117 = arith.subf %113, %116 : vector<8x8xf32>
    %118 = math.exp %117 : vector<8x8xf32>
    %cst_37 = arith.constant dense<0.000000e+00> : vector<8xf32>
    %119 = vector.multi_reduction <add>, %118, %cst_37 [1] : vector<8x8xf32> to vector<8xf32>
    %120 = vector.shape_cast %119 : vector<8xf32> to vector<8x1xf32>
    %121 = tpu.reciprocal %120 {approx = true} : vector<8x1xf32> -> vector<8x1xf32>
    %122 = vector.broadcast %121 : vector<8x1xf32> to vector<8x8xf32>
    %123 = arith.mulf %118, %122 : vector<8x8xf32>
    %124 = arith.truncf %123 : vector<8x8xf32> to vector<8x8xbf16>
    %cst_38 = arith.constant dense<0.000000e+00> : vector<8x8xf32>
    %125 = tpu.matmul %124, %112, %cst_38 {dimension_numbers = #tpu.dot_dimension_numbers<[1], [0], [0], [1], [0, 0, 1, 1], [], []>} : vector<8x8xbf16>, vector<8x8xbf16>, vector<8x8xf32> -> vector<8x8xf32>
    %126 = arith.truncf %125 : vector<8x8xf32> to vector<8x8xbf16>
    %127 = vector.extract_strided_slice %5 {offsets = [0, 0], sizes = [8, 64], strides = [1, 1]} : vector<32x64xbf16> to vector<8x64xbf16>
    %cst_39 = arith.constant dense<0.000000e+00> : vector<8x64xf32>
    %128 = tpu.matmul %126, %127, %cst_39 {dimension_numbers = #tpu.dot_dimension_numbers<[1], [0], [0], [1], [0, 0, 1, 1], [], []>} : vector<8x8xbf16>, vector<8x64xbf16>, vector<8x64xf32> -> vector<8x64xf32>
    %129 = arith.addf %109, %128 : vector<8x64xf32>
    %130 = vector.extract_strided_slice %107 {offsets = [0, 8], sizes = [8, 8], strides = [1, 1]} : vector<8x32xbf16> to vector<8x8xbf16>
    %131 = vector.extract_strided_slice %108 {offsets = [0, 8], sizes = [8, 8], strides = [1, 1]} : vector<8x64xbf16> to vector<8x8xbf16>
    %132 = vector.extract_strided_slice %108 {offsets = [0, 40], sizes = [8, 8], strides = [1, 1]} : vector<8x64xbf16> to vector<8x8xbf16>
    %cst_40 = arith.constant dense<0.000000e+00> : vector<8x8xf32>
    %133 = tpu.matmul %130, %131, %cst_40 {dimension_numbers = #tpu.dot_dimension_numbers<[1], [1], [0], [0], [0, 0, 1, 0], [], []>} : vector<8x8xbf16>, vector<8x8xbf16>, vector<8x8xf32> -> vector<8x8xf32>
    %cst_41 = arith.constant dense<0xFF800000> : vector<8xf32>
    %134 = vector.multi_reduction <maximumf>, %133, %cst_41 [1] : vector<8x8xf32> to vector<8xf32>
    %135 = vector.shape_cast %134 : vector<8xf32> to vector<8x1xf32>
    %136 = vector.broadcast %135 : vector<8x1xf32> to vector<8x8xf32>
    %137 = arith.subf %133, %136 : vector<8x8xf32>
    %138 = math.exp %137 : vector<8x8xf32>
    %cst_42 = arith.constant dense<0.000000e+00> : vector<8xf32>
    %139 = vector.multi_reduction <add>, %138, %cst_42 [1] : vector<8x8xf32> to vector<8xf32>
    %140 = vector.shape_cast %139 : vector<8xf32> to vector<8x1xf32>
    %141 = tpu.reciprocal %140 {approx = true} : vector<8x1xf32> -> vector<8x1xf32>
    %142 = vector.broadcast %141 : vector<8x1xf32> to vector<8x8xf32>
    %143 = arith.mulf %138, %142 : vector<8x8xf32>
    %144 = arith.truncf %143 : vector<8x8xf32> to vector<8x8xbf16>
    %cst_43 = arith.constant dense<0.000000e+00> : vector<8x8xf32>
    %145 = tpu.matmul %144, %132, %cst_43 {dimension_numbers = #tpu.dot_dimension_numbers<[1], [0], [0], [1], [0, 0, 1, 1], [], []>} : vector<8x8xbf16>, vector<8x8xbf16>, vector<8x8xf32> -> vector<8x8xf32>
    %146 = arith.truncf %145 : vector<8x8xf32> to vector<8x8xbf16>
    %147 = vector.extract_strided_slice %5 {offsets = [8, 0], sizes = [8, 64], strides = [1, 1]} : vector<32x64xbf16> to vector<8x64xbf16>
    %cst_44 = arith.constant dense<0.000000e+00> : vector<8x64xf32>
    %148 = tpu.matmul %146, %147, %cst_44 {dimension_numbers = #tpu.dot_dimension_numbers<[1], [0], [0], [1], [0, 0, 1, 1], [], []>} : vector<8x8xbf16>, vector<8x64xbf16>, vector<8x64xf32> -> vector<8x64xf32>
    %149 = arith.addf %129, %148 : vector<8x64xf32>
    %150 = vector.extract_strided_slice %107 {offsets = [0, 16], sizes = [8, 8], strides = [1, 1]} : vector<8x32xbf16> to vector<8x8xbf16>
    %151 = vector.extract_strided_slice %108 {offsets = [0, 16], sizes = [8, 8], strides = [1, 1]} : vector<8x64xbf16> to vector<8x8xbf16>
    %152 = vector.extract_strided_slice %108 {offsets = [0, 48], sizes = [8, 8], strides = [1, 1]} : vector<8x64xbf16> to vector<8x8xbf16>
    %cst_45 = arith.constant dense<0.000000e+00> : vector<8x8xf32>
    %153 = tpu.matmul %150, %151, %cst_45 {dimension_numbers = #tpu.dot_dimension_numbers<[1], [1], [0], [0], [0, 0, 1, 0], [], []>} : vector<8x8xbf16>, vector<8x8xbf16>, vector<8x8xf32> -> vector<8x8xf32>
    %cst_46 = arith.constant dense<0xFF800000> : vector<8xf32>
    %154 = vector.multi_reduction <maximumf>, %153, %cst_46 [1] : vector<8x8xf32> to vector<8xf32>
    %155 = vector.shape_cast %154 : vector<8xf32> to vector<8x1xf32>
    %156 = vector.broadcast %155 : vector<8x1xf32> to vector<8x8xf32>
    %157 = arith.subf %153, %156 : vector<8x8xf32>
    %158 = math.exp %157 : vector<8x8xf32>
    %cst_47 = arith.constant dense<0.000000e+00> : vector<8xf32>
    %159 = vector.multi_reduction <add>, %158, %cst_47 [1] : vector<8x8xf32> to vector<8xf32>
    %160 = vector.shape_cast %159 : vector<8xf32> to vector<8x1xf32>
    %161 = tpu.reciprocal %160 {approx = true} : vector<8x1xf32> -> vector<8x1xf32>
    %162 = vector.broadcast %161 : vector<8x1xf32> to vector<8x8xf32>
    %163 = arith.mulf %158, %162 : vector<8x8xf32>
    %164 = arith.truncf %163 : vector<8x8xf32> to vector<8x8xbf16>
    %cst_48 = arith.constant dense<0.000000e+00> : vector<8x8xf32>
    %165 = tpu.matmul %164, %152, %cst_48 {dimension_numbers = #tpu.dot_dimension_numbers<[1], [0], [0], [1], [0, 0, 1, 1], [], []>} : vector<8x8xbf16>, vector<8x8xbf16>, vector<8x8xf32> -> vector<8x8xf32>
    %166 = arith.truncf %165 : vector<8x8xf32> to vector<8x8xbf16>
    %167 = vector.extract_strided_slice %5 {offsets = [16, 0], sizes = [8, 64], strides = [1, 1]} : vector<32x64xbf16> to vector<8x64xbf16>
    %cst_49 = arith.constant dense<0.000000e+00> : vector<8x64xf32>
    %168 = tpu.matmul %166, %167, %cst_49 {dimension_numbers = #tpu.dot_dimension_numbers<[1], [0], [0], [1], [0, 0, 1, 1], [], []>} : vector<8x8xbf16>, vector<8x64xbf16>, vector<8x64xf32> -> vector<8x64xf32>
    %169 = arith.addf %149, %168 : vector<8x64xf32>
    %170 = vector.extract_strided_slice %107 {offsets = [0, 24], sizes = [8, 8], strides = [1, 1]} : vector<8x32xbf16> to vector<8x8xbf16>
    %171 = vector.extract_strided_slice %108 {offsets = [0, 24], sizes = [8, 8], strides = [1, 1]} : vector<8x64xbf16> to vector<8x8xbf16>
    %172 = vector.extract_strided_slice %108 {offsets = [0, 56], sizes = [8, 8], strides = [1, 1]} : vector<8x64xbf16> to vector<8x8xbf16>
    %cst_50 = arith.constant dense<0.000000e+00> : vector<8x8xf32>
    %173 = tpu.matmul %170, %171, %cst_50 {dimension_numbers = #tpu.dot_dimension_numbers<[1], [1], [0], [0], [0, 0, 1, 0], [], []>} : vector<8x8xbf16>, vector<8x8xbf16>, vector<8x8xf32> -> vector<8x8xf32>
    %cst_51 = arith.constant dense<0xFF800000> : vector<8xf32>
    %174 = vector.multi_reduction <maximumf>, %173, %cst_51 [1] : vector<8x8xf32> to vector<8xf32>
    %175 = vector.shape_cast %174 : vector<8xf32> to vector<8x1xf32>
    %176 = vector.broadcast %175 : vector<8x1xf32> to vector<8x8xf32>
    %177 = arith.subf %173, %176 : vector<8x8xf32>
    %178 = math.exp %177 : vector<8x8xf32>
    %cst_52 = arith.constant dense<0.000000e+00> : vector<8xf32>
    %179 = vector.multi_reduction <add>, %178, %cst_52 [1] : vector<8x8xf32> to vector<8xf32>
    %180 = vector.shape_cast %179 : vector<8xf32> to vector<8x1xf32>
    %181 = tpu.reciprocal %180 {approx = true} : vector<8x1xf32> -> vector<8x1xf32>
    %182 = vector.broadcast %181 : vector<8x1xf32> to vector<8x8xf32>
    %183 = arith.mulf %178, %182 : vector<8x8xf32>
    %184 = arith.truncf %183 : vector<8x8xf32> to vector<8x8xbf16>
    %cst_53 = arith.constant dense<0.000000e+00> : vector<8x8xf32>
    %185 = tpu.matmul %184, %172, %cst_53 {dimension_numbers = #tpu.dot_dimension_numbers<[1], [0], [0], [1], [0, 0, 1, 1], [], []>} : vector<8x8xbf16>, vector<8x8xbf16>, vector<8x8xf32> -> vector<8x8xf32>
    %186 = arith.truncf %185 : vector<8x8xf32> to vector<8x8xbf16>
    %187 = vector.extract_strided_slice %5 {offsets = [24, 0], sizes = [8, 64], strides = [1, 1]} : vector<32x64xbf16> to vector<8x64xbf16>
    %cst_54 = arith.constant dense<0.000000e+00> : vector<8x64xf32>
    %188 = tpu.matmul %186, %187, %cst_54 {dimension_numbers = #tpu.dot_dimension_numbers<[1], [0], [0], [1], [0, 0, 1, 1], [], []>} : vector<8x8xbf16>, vector<8x64xbf16>, vector<8x64xf32> -> vector<8x64xf32>
    %189 = arith.addf %169, %188 : vector<8x64xf32>
    %c8 = arith.constant 8 : index
    %c0_55 = arith.constant 0 : index
    %190 = vector.load %arg3[%c8, %c0_55] : memref<16x64xf32, #tpu.memory_space<vmem>>, vector<8x64xf32>
    tpu.vector_store %arg3[%c8, %c0_55], %189 {strides = array<i32>} : memref<16x64xf32, #tpu.memory_space<vmem>>, vector<8x64xf32>,
    return
  }
}

</mosaic_0001>

<llo_original>
// kernel: _lambda_.1
$region0: #{_lambda_.1}
  #allocation0 [shape = 'u32[]', space=smem, size = 0x4, offset = 0x4, fixed_abs, tag = 'smem constant byte address 0x4 - core index']
  #allocation1 [shape = 'u32[144,128]{1,0:T(1,128)}', space=vmem, size = 0x12000, scoped, tag = 'internal scratch']
  %s0 = inlined_call_operand.vmem [shape: bf16[16,32], index: 0, kind: input, shape index: {}]
  %s1 = inlined_call_operand.vmem [shape: bf16[16,16], index: 1, kind: input, shape index: {}]
  %s2 = inlined_call_operand.vmem [shape: bf16[136,64], index: 2, kind: input, shape index: {}]
  %s3 = inlined_call_operand.hbm [shape: f32[16,64], index: 3, kind: output, shape index: {}]
  %s4 = sld [smem:[#allocation0]]
  $region22: #{_lambda_.1} parent=0
    _
  %s6 = ssub.s32 1, %s4
  %s7 = scalar_select 0, %s6, %s4
  $region1: #{_lambda_.1} parent=0
    #allocation2 [shape = 'u8[8192]{0}', space=vmem, size = 0x2000, scoped, tag = 'output window, operand 0, single buffered']
    #allocation3 [shape = 's32[1]{0}', space=sflag, size = 0x4, scoped, tag = 'scoped memory for _lambda_.1']
    %8 = vsyncpa [#allocation3], 0
    // Predicated region
    $region2: #{_lambda_.1} parent=1 // pred_check
      _
    $region3: #{_lambda_.1} parent=1 // pred_check_branch
      %10 = sbr.rel (0) target = $region5
    $region4: #{_lambda_.1} parent=1 // pred_region
      _
    $region5: #{_lambda_.1} parent=1 // pred_fallthru
      _
    // Predicated region
    $region6: #{_lambda_.1} parent=1 // pred_check
      _
    $region7: #{_lambda_.1} parent=1 // pred_check_branch
      %12 = sbr.rel (0) target = $region9
    $region8: #{_lambda_.1} parent=1 // pred_region
      _
    $region9: #{_lambda_.1} parent=1 // pred_fallthru
      _
    // Predicated region
    $region10: #{_lambda_.1} parent=1 // pred_check
      _
    $region11: #{_lambda_.1} parent=1 // pred_check_branch
      %14 = sbr.rel (0) target = $region13
    $region12: #{_lambda_.1} parent=1 // pred_region
      _
    $region13: #{_lambda_.1} parent=1 // pred_fallthru
      _
    %v16 = vld [vmem:[%s0] sm:$0xf]
    %v17 = vld [vmem:[%s0 + $0x4] sm:$0xf]
    %v18 = vld [vmem:[%s1] sm:$0xf]
    %v19 = vld [vmem:[%s1 + $0x4] sm:$0xf]
    %v20 = vld [vmem:[%s2] sm:$0xf]
    %v21 = vld [vmem:[%s2 + $0x4] sm:$0xf]
    %v22 = vld [vmem:[%s2 + $0x8] sm:$0xf]
    %v23 = vld [vmem:[%s2 + $0xc] sm:$0xf]
    %v24 = vld [vmem:[%s2 + $0x10] sm:$0xf]
    %v25 = vld [vmem:[%s2 + $0x14] sm:$0xf]
    %v26 = vld [vmem:[%s2 + $0x18] sm:$0xf]
    %v27 = vld [vmem:[%s2 + $0x1c] sm:$0xf]
    %v28 = vld [vmem:[%s2 + $0x20] sm:$0xf]
    %v29 = vld [vmem:[%s2 + $0x24] sm:$0xf]
    %v30 = vld [vmem:[%s2 + $0x28] sm:$0xf]
    %v31 = vld [vmem:[%s2 + $0x2c] sm:$0xf]
    %v32 = vld [vmem:[%s2 + $0x30] sm:$0xf]
    %v33 = vld [vmem:[%s2 + $0x34] sm:$0xf]
    %v34 = vld [vmem:[%s2 + $0x38] sm:$0x1]
    %v35 = vunpack.c.l.bf16 %v34
    %v36 = vld [vmem:[%s2 + $0x3c] sm:$0x1]
    %v37 = vunpack.c.l.bf16 %v36
    %v38 = vld [vmem:[%s2 + $0x40] sm:$0x1]
    %v39 = vunpack.c.l.bf16 %v38
    %v40 = vlaneseq
    %v41 = vshrl.u32 %v40, 7
    %v42 = vsub.s32 0, %v41
    %v43 = vrot.slane %v35, %v42
    %v46 = vunpack.c.l.b16 %v16
    %v47 = vunpack.c.l.b16 %v17
    %v48 = vpack.c.b16 %v47, %v46
    %v53 = vunpack.c.l.b16 %v20
    %v54 = vunpack.c.l.b16 %v21
    %v55 = vunpack.c.l.b16 %v22
    %v56 = vunpack.c.l.b16 %v23
    %v57 = vpack.c.b16 %v54, %v53
    %v58 = vpack.c.b16 %v56, %v55
    %vm61 = vcmask 261120
    %v63 = vsel %vm61, %v48, 0
    %65 = vmatprep.subr.bf16.mxu0 0
    %66 = vmatpush1.bf16.msra.mxu0 0
    %67 = vmatprep.subr.bf16.mxu0 0
    %68 = vmatpush1.bf16.msra.mxu0 0
    %69 = vmatprep.subr.bf16.mxu0 0
    %70 = vmatpush1.bf16.msra.mxu0 0
    %71 = vmatprep.subr.bf16.mxu0 0
    %72 = vmatpush1.bf16.msra.mxu0 0
    %73 = vmatprep.subr.bf16.mxu0 0
    %74 = vmatpush1.bf16.msra.mxu0 0
    %75 = vmatprep.subr.bf16.mxu0 0
    %76 = vmatpush1.bf16.msra.mxu0 0
    %77 = vmatprep.subr.bf16.mxu0 0
    %78 = vmatpush1.bf16.msra.mxu0 %v58
    %79 = vmatprep.subr.bf16.mxu0 0
    %80 = vmatpush1.bf16.msra.mxu0 %v57
    %81 = vmatprep.subr.bf16.mxu0 0
    %82 = vmatpush2.bf16.msra.mxu0 0
    %83 = vmatprep.subr.bf16.mxu0 0
    %84 = vmatpush2.bf16.msra.mxu0 0
    %85 = vmatprep.subr.bf16.mxu0 0
    %86 = vmatpush2.bf16.msra.mxu0 0
    %87 = vmatprep.subr.bf16.mxu0 0
    %88 = vmatpush2.bf16.msra.mxu0 0
    %89 = vmatprep.subr.bf16.mxu0 0
    %90 = vmatpush2.bf16.msra.mxu0 0
    %91 = vmatprep.subr.bf16.mxu0 0
    %92 = vmatpush2.bf16.msra.mxu0 0
    %93 = vmatprep.subr.bf16.mxu0 0
    %94 = vmatpush2.bf16.msra.mxu0 0
    %95 = vmatprep.subr.bf16.mxu0 0
    %96 = vmatpush2.bf16.msra.mxu0 0
    %97 = vmatprep.mubr.bf16.mxu0 0
    %98 = vmatmul.mubr.bf16.gmra.mxu0 %v63
    %v99 = vpop.f32.mrf.mxu0
    %v100 = vadd.f32 %v43, %v99
    %v101 = vpop.f32.mrf.mxu0
    %v102 = vpop.f32.mrf.mxu0
    %v103 = vadd.f32 %v43, %v102
    %v104 = vpop.f32.mrf.mxu0
    %105 = vdwg.mxu0
    %v106 = vpack.c.bf16 %v103, %v100
    %v107 = vlaneseq
    %v108 = vshrl.u32 %v107, 7
    %v109 = vsub.s32 0, %v108
    %v110 = vrot.slane %v37, %v109
    %v113 = vunpack.c.l.b16 %v18
    %v114 = vunpack.c.l.b16 %v19
    %v115 = vpack.c.b16 %v114, %v113
    %v118 = vunpack.c.l.b16 %v24
    %v119 = vunpack.c.l.b16 %v25
    %v120 = vpack.c.b16 %v119, %v118
    %vm122 = vcmask 130048
    %v124 = vsel %vm122, %v115, 0
    %126 = vmatprep.subr.bf16.mxu0 0
    %127 = vmatpush1.bf16.msra.mxu0 0
    %128 = vmatprep.subr.bf16.mxu0 0
    %129 = vmatpush1.bf16.msra.mxu0 0
    %130 = vmatprep.subr.bf16.mxu0 0
    %131 = vmatpush1.bf16.msra.mxu0 0
    %132 = vmatprep.subr.bf16.mxu0 0
    %133 = vmatpush1.bf16.msra.mxu0 0
    %134 = vmatprep.subr.bf16.mxu0 0
    %135 = vmatpush1.bf16.msra.mxu0 0
    %136 = vmatprep.subr.bf16.mxu0 0
    %137 = vmatpush1.bf16.msra.mxu0 0
    %138 = vmatprep.subr.bf16.mxu0 0
    %139 = vmatpush1.bf16.msra.mxu0 0
    %140 = vmatprep.subr.bf16.mxu0 0
    %141 = vmatpush1.bf16.msra.mxu0 %v120
    %142 = vmatprep.subr.bf16.mxu0 0
    %143 = vmatpush2.bf16.msra.mxu0 0
    %144 = vmatprep.subr.bf16.mxu0 0
    %145 = vmatpush2.bf16.msra.mxu0 0
    %146 = vmatprep.subr.bf16.mxu0 0
    %147 = vmatpush2.bf16.msra.mxu0 0
    %148 = vmatprep.subr.bf16.mxu0 0
    %149 = vmatpush2.bf16.msra.mxu0 0
    %150 = vmatprep.subr.bf16.mxu0 0
    %151 = vmatpush2.bf16.msra.mxu0 0
    %152 = vmatprep.subr.bf16.mxu0 0
    %153 = vmatpush2.bf16.msra.mxu0 0
    %154 = vmatprep.subr.bf16.mxu0 0
    %155 = vmatpush2.bf16.msra.mxu0 0
    %156 = vmatprep.subr.bf16.mxu0 0
    %157 = vmatpush2.bf16.msra.mxu0 0
    %158 = vmatprep.mubr.bf16.mxu0 0
    %159 = vmatmul.mubr.bf16.gmra.mxu0 %v124
    %v160 = vpop.f32.mrf.mxu0
    %v161 = vadd.f32 %v110, %v160
    %v162 = vpop.f32.mrf.mxu0
    %v163 = vpop.f32.mrf.mxu0
    %v164 = vadd.f32 %v110, %v163
    %v165 = vpop.f32.mrf.mxu0
    %166 = vdwg.mxu0
    %v167 = vpack.c.bf16 %v164, %v161
    %v168 = vlaneseq
    %v169 = vshrl.u32 %v168, 7
    %v170 = vsub.s32 0, %v169
    %v171 = vrot.slane %v39, %v170
    %v176 = vunpack.c.l.b16 %v26
    %v177 = vunpack.c.l.b16 %v27
    %v178 = vunpack.c.l.b16 %v28
    %v179 = vunpack.c.l.b16 %v29
    %v180 = vpack.c.b16 %v177, %v176
    %v181 = vpack.c.b16 %v179, %v178
    %184 = vmatprep.subr.bf16.mxu0 0
    %185 = vmatpush1.bf16.msra.mxu0 0
    %186 = vmatprep.subr.bf16.mxu0 0
    %187 = vmatpush1.bf16.msra.mxu0 0
    %188 = vmatprep.subr.bf16.mxu0 0
    %189 = vmatpush1.bf16.msra.mxu0 0
    %190 = vmatprep.subr.bf16.mxu0 0
    %191 = vmatpush1.bf16.msra.mxu0 0
    %192 = vmatprep.subr.bf16.mxu0 0
    %193 = vmatpush1.bf16.msra.mxu0 0
    %194 = vmatprep.subr.bf16.mxu0 0
    %195 = vmatpush1.bf16.msra.mxu0 0
    %196 = vmatprep.subr.bf16.mxu0 0
    %197 = vmatpush1.bf16.msra.mxu0 %v181
    %198 = vmatprep.subr.bf16.mxu0 0
    %199 = vmatpush1.bf16.msra.mxu0 %v180
    %200 = vmatprep.subr.bf16.mxu0 0
    %201 = vmatpush2.bf16.msra.mxu0 0
    %202 = vmatprep.subr.bf16.mxu0 0
    %203 = vmatpush2.bf16.msra.mxu0 0
    %204 = vmatprep.subr.bf16.mxu0 0
    %205 = vmatpush2.bf16.msra.mxu0 0
    %206 = vmatprep.subr.bf16.mxu0 0
    %207 = vmatpush2.bf16.msra.mxu0 0
    %208 = vmatprep.subr.bf16.mxu0 0
    %209 = vmatpush2.bf16.msra.mxu0 0
    %210 = vmatprep.subr.bf16.mxu0 0
    %211 = vmatpush2.bf16.msra.mxu0 0
    %212 = vmatprep.subr.bf16.mxu0 0
    %213 = vmatpush2.bf16.msra.mxu0 0
    %214 = vmatprep.subr.bf16.mxu0 0
    %215 = vmatpush2.bf16.msra.mxu0 0
    %216 = vmatprep.mubr.bf16.mxu0 0
    %217 = vmatmul.mubr.bf16.gmra.mxu0 %v63
    %v218 = vpop.f32.mrf.mxu0
    %v219 = vadd.f32 %v171, %v218
    %v220 = vpop.f32.mrf.mxu0
    %v221 = vpop.f32.mrf.mxu0
    %v222 = vadd.f32 %v171, %v221
    %v223 = vpop.f32.mrf.mxu0
    %224 = vdwg.mxu0
    %vm225 = vcmask 64512
    %v227 = vsel %vm225, %v106, 0
    %v230 = vsel %vm225, %v167, 0
    %232 = vmatprep.subr.bf16.mxu0 0
    %233 = vmatpush1.bf16.xpose.msra.mxu0 0
    %234 = vmatprep.subr.bf16.mxu0 0
    %235 = vmatpush1.bf16.xpose.msra.mxu0 0
    %236 = vmatprep.subr.bf16.mxu0 0
    %237 = vmatpush1.bf16.xpose.msra.mxu0 0
    %238 = vmatprep.subr.bf16.mxu0 0
    %239 = vmatpush1.bf16.xpose.msra.mxu0 0
    %240 = vmatprep.subr.bf16.mxu0 0
    %241 = vmatpush1.bf16.xpose.msra.mxu0 0
    %242 = vmatprep.subr.bf16.mxu0 0
    %243 = vmatpush1.bf16.xpose.msra.mxu0 0
    %244 = vmatprep.subr.bf16.mxu0 0
    %245 = vmatpush1.bf16.xpose.msra.mxu0 0
    %246 = vmatprep.subr.bf16.mxu0 0
    %247 = vmatpush1.bf16.xpose.msra.mxu0 %v230
    %248 = vmatprep.subr.bf16.mxu0 0
    %249 = vmatpush2.bf16.xpose.msra.mxu0 0
    %250 = vmatprep.subr.bf16.mxu0 0
    %251 = vmatpush2.bf16.xpose.msra.mxu0 0
    %252 = vmatprep.subr.bf16.mxu0 0
    %253 = vmatpush2.bf16.xpose.msra.mxu0 0
    %254 = vmatprep.subr.bf16.mxu0 0
    %255 = vmatpush2.bf16.xpose.msra.mxu0 0
    %256 = vmatprep.subr.bf16.mxu0 0
    %257 = vmatpush2.bf16.xpose.msra.mxu0 0
    %258 = vmatprep.subr.bf16.mxu0 0
    %259 = vmatpush2.bf16.xpose.msra.mxu0 0
    %260 = vmatprep.subr.bf16.mxu0 0
    %261 = vmatpush2.bf16.xpose.msra.mxu0 0
    %262 = vmatprep.subr.bf16.mxu0 0
    %263 = vmatpush2.bf16.xpose.msra.mxu0 0
    %264 = vmatprep.mubr.bf16.mxu0 0
    %265 = vmatmul.mubr.bf16.gmra.mxu0 %v227
    %v266 = vpop.f32.mrf.mxu0
    %v267 = vadd.f32 0.0, %v266
    %v268 = vpop.f32.mrf.mxu0
    %v269 = vpop.f32.mrf.mxu0
    %v270 = vpop.f32.mrf.mxu0
    %271 = vdwg.mxu0
    %v272 = vsel %vm225, %v267, -inf
    %273 = vmax.xlane.f32.xlu0 %v272
    %v274 = vpop.xlane.xlu0 %273
    %v275 = vsub.f32 %v267, %v274
    %v276 = vmul.f32 %v275, 1.442695
    %v277 = vpow.pop %v276
    %v278 = vsel %vm225, %v277, 0.0
    %279 = vadd.xlane.f32.xlu0 %v278
    %v280 = vpop.xlane.xlu0 %279
    %v281 = vrcp.pop %v280
    %v282 = vmul.f32 %v277, %v281
    %v283 = vpack.c.bf16 %v282, %v282
    %285 = vrot.lane.b32.xlu0 %v167, 96
    %v286 = vpop.permute.xlu0 %285
    %v288 = vsel %vm225, %v283, 0
    %vm290 = vcmask 1043456
    %v292 = vsel %vm290, %v286, 0
    %294 = vmatprep.subr.bf16.mxu0 0
    %295 = vmatpush1.bf16.msra.mxu0 0
    %296 = vmatprep.subr.bf16.mxu0 0
    %297 = vmatpush1.bf16.msra.mxu0 0
    %298 = vmatprep.subr.bf16.mxu0 0
    %299 = vmatpush1.bf16.msra.mxu0 0
    %300 = vmatprep.subr.bf16.mxu0 0
    %301 = vmatpush1.bf16.msra.mxu0 0
    %302 = vmatprep.subr.bf16.mxu0 0
    %303 = vmatpush1.bf16.msra.mxu0 0
    %304 = vmatprep.subr.bf16.mxu0 0
    %305 = vmatpush1.bf16.msra.mxu0 0
    %306 = vmatprep.subr.bf16.mxu0 0
    %307 = vmatpush1.bf16.msra.mxu0 0
    %308 = vmatprep.subr.bf16.mxu0 0
    %309 = vmatpush1.bf16.msra.mxu0 %v292
    %310 = vmatprep.subr.bf16.mxu0 0
    %311 = vmatpush2.bf16.msra.mxu0 0
    %312 = vmatprep.subr.bf16.mxu0 0
    %313 = vmatpush2.bf16.msra.mxu0 0
    %314 = vmatprep.subr.bf16.mxu0 0
    %315 = vmatpush2.bf16.msra.mxu0 0
    %316 = vmatprep.subr.bf16.mxu0 0
    %317 = vmatpush2.bf16.msra.mxu0 0
    %318 = vmatprep.subr.bf16.mxu0 0
    %319 = vmatpush2.bf16.msra.mxu0 0
    %320 = vmatprep.subr.bf16.mxu0 0
    %321 = vmatpush2.bf16.msra.mxu0 0
    %322 = vmatprep.subr.bf16.mxu0 0
    %323 = vmatpush2.bf16.msra.mxu0 0
    %324 = vmatprep.subr.bf16.mxu0 0
    %325 = vmatpush2.bf16.msra.mxu0 0
    %326 = vmatprep.mubr.bf16.mxu0 0
    %327 = vmatmul.mubr.bf16.gmra.mxu0 %v288
    %v328 = vpop.f32.mrf.mxu0
    %v329 = vadd.f32 0.0, %v328
    %v330 = vpop.f32.mrf.mxu0
    %v331 = vpop.f32.mrf.mxu0
    %v332 = vpop.f32.mrf.mxu0
    %333 = vdwg.mxu0
    %v334 = vpack.c.bf16 %v329, %v329
    %v336 = vsel %vm225, %v334, 0
    %v339 = vsel %vm290, %v30, 0
    %341 = vmatprep.subr.bf16.mxu0 0
    %342 = vmatpush1.bf16.msra.mxu0 0
    %343 = vmatprep.subr.bf16.mxu0 0
    %344 = vmatpush1.bf16.msra.mxu0 0
    %345 = vmatprep.subr.bf16.mxu0 0
    %346 = vmatpush1.bf16.msra.mxu0 0
    %347 = vmatprep.subr.bf16.mxu0 0
    %348 = vmatpush1.bf16.msra.mxu0 0
    %349 = vmatprep.subr.bf16.mxu0 0
    %350 = vmatpush1.bf16.msra.mxu0 0
    %351 = vmatprep.subr.bf16.mxu0 0
    %352 = vmatpush1.bf16.msra.mxu0 0
    %353 = vmatprep.subr.bf16.mxu0 0
    %354 = vmatpush1.bf16.msra.mxu0 0
    %355 = vmatprep.subr.bf16.mxu0 0
    %356 = vmatpush1.bf16.msra.mxu0 %v339
    %357 = vmatprep.subr.bf16.mxu0 0
    %358 = vmatpush2.bf16.msra.mxu0 0
    %359 = vmatprep.subr.bf16.mxu0 0
    %360 = vmatpush2.bf16.msra.mxu0 0
    %361 = vmatprep.subr.bf16.mxu0 0
    %362 = vmatpush2.bf16.msra.mxu0 0
    %363 = vmatprep.subr.bf16.mxu0 0
    %364 = vmatpush2.bf16.msra.mxu0 0
    %365 = vmatprep.subr.bf16.mxu0 0
    %366 = vmatpush2.bf16.msra.mxu0 0
    %367 = vmatprep.subr.bf16.mxu0 0
    %368 = vmatpush2.bf16.msra.mxu0 0
    %369 = vmatprep.subr.bf16.mxu0 0
    %370 = vmatpush2.bf16.msra.mxu0 0
    %371 = vmatprep.subr.bf16.mxu0 0
    %372 = vmatpush2.bf16.msra.mxu0 0
    %373 = vmatprep.mubr.bf16.mxu0 0
    %374 = vmatmul.mubr.bf16.gmra.mxu0 %v336
    %v375 = vpop.f32.mrf.mxu0
    %v376 = vadd.f32 0.0, %v375
    %v377 = vpop.f32.mrf.mxu0
    %v378 = vpop.f32.mrf.mxu0
    %v379 = vpop.f32.mrf.mxu0
    %380 = vdwg.mxu0
    %v381 = vadd.f32 %v219, %v376
    %383 = vrot.lane.b32.xlu0 %v106, 120
    %v384 = vpop.permute.xlu0 %383
    %385 = vrot.lane.b32.xlu0 %v167, 120
    %v386 = vpop.permute.xlu0 %385
    %v388 = vsel %vm225, %v384, 0
    %v391 = vsel %vm225, %v386, 0
    %393 = vmatprep.subr.bf16.mxu0 0
    %394 = vmatpush1.bf16.xpose.msra.mxu0 0
    %395 = vmatprep.subr.bf16.mxu0 0
    %396 = vmatpush1.bf16.xpose.msra.mxu0 0
    %397 = vmatprep.subr.bf16.mxu0 0
    %398 = vmatpush1.bf16.xpose.msra.mxu0 0
    %399 = vmatprep.subr.bf16.mxu0 0
    %400 = vmatpush1.bf16.xpose.msra.mxu0 0
    %401 = vmatprep.subr.bf16.mxu0 0
    %402 = vmatpush1.bf16.xpose.msra.mxu0 0
    %403 = vmatprep.subr.bf16.mxu0 0
    %404 = vmatpush1.bf16.xpose.msra.mxu0 0
    %405 = vmatprep.subr.bf16.mxu0 0
    %406 = vmatpush1.bf16.xpose.msra.mxu0 0
    %407 = vmatprep.subr.bf16.mxu0 0
    %408 = vmatpush1.bf16.xpose.msra.mxu0 %v391
    %409 = vmatprep.subr.bf16.mxu0 0
    %410 = vmatpush2.bf16.xpose.msra.mxu0 0
    %411 = vmatprep.subr.bf16.mxu0 0
    %412 = vmatpush2.bf16.xpose.msra.mxu0 0
    %413 = vmatprep.subr.bf16.mxu0 0
    %414 = vmatpush2.bf16.xpose.msra.mxu0 0
    %415 = vmatprep.subr.bf16.mxu0 0
    %416 = vmatpush2.bf16.xpose.msra.mxu0 0
    %417 = vmatprep.subr.bf16.mxu0 0
    %418 = vmatpush2.bf16.xpose.msra.mxu0 0
    %419 = vmatprep.subr.bf16.mxu0 0
    %420 = vmatpush2.bf16.xpose.msra.mxu0 0
    %421 = vmatprep.subr.bf16.mxu0 0
    %422 = vmatpush2.bf16.xpose.msra.mxu0 0
    %423 = vmatprep.subr.bf16.mxu0 0
    %424 = vmatpush2.bf16.xpose.msra.mxu0 0
    %425 = vmatprep.mubr.bf16.mxu0 0
    %426 = vmatmul.mubr.bf16.gmra.mxu0 %v388
    %v427 = vpop.f32.mrf.mxu0
    %v428 = vadd.f32 0.0, %v427
    %v429 = vpop.f32.mrf.mxu0
    %v430 = vpop.f32.mrf.mxu0
    %v431 = vpop.f32.mrf.mxu0
    %432 = vdwg.mxu0
    %v433 = vsel %vm225, %v428, -inf
    %434 = vmax.xlane.f32.xlu0 %v433
    %v435 = vpop.xlane.xlu0 %434
    %v436 = vsub.f32 %v428, %v435
    %v437 = vmul.f32 %v436, 1.442695
    %v438 = vpow.pop %v437
    %v439 = vsel %vm225, %v438, 0.0
    %440 = vadd.xlane.f32.xlu0 %v439
    %v441 = vpop.xlane.xlu0 %440
    %v442 = vrcp.pop %v441
    %v443 = vmul.f32 %v438, %v442
    %v444 = vpack.c.bf16 %v443, %v443
    %445 = vrot.lane.b32.xlu0 %v167, 88
    %v446 = vpop.permute.xlu0 %445
    %v448 = vsel %vm225, %v444, 0
    %v451 = vsel %vm290, %v446, 0
    %453 = vmatprep.subr.bf16.mxu0 0
    %454 = vmatpush1.bf16.msra.mxu0 0
    %455 = vmatprep.subr.bf16.mxu0 0
    %456 = vmatpush1.bf16.msra.mxu0 0
    %457 = vmatprep.subr.bf16.mxu0 0
    %458 = vmatpush1.bf16.msra.mxu0 0
    %459 = vmatprep.subr.bf16.mxu0 0
    %460 = vmatpush1.bf16.msra.mxu0 0
    %461 = vmatprep.subr.bf16.mxu0 0
    %462 = vmatpush1.bf16.msra.mxu0 0
    %463 = vmatprep.subr.bf16.mxu0 0
    %464 = vmatpush1.bf16.msra.mxu0 0
    %465 = vmatprep.subr.bf16.mxu0 0
    %466 = vmatpush1.bf16.msra.mxu0 0
    %467 = vmatprep.subr.bf16.mxu0 0
    %468 = vmatpush1.bf16.msra.mxu0 %v451
    %469 = vmatprep.subr.bf16.mxu0 0
    %470 = vmatpush2.bf16.msra.mxu0 0
    %471 = vmatprep.subr.bf16.mxu0 0
    %472 = vmatpush2.bf16.msra.mxu0 0
    %473 = vmatprep.subr.bf16.mxu0 0
    %474 = vmatpush2.bf16.msra.mxu0 0
    %475 = vmatprep.subr.bf16.mxu0 0
    %476 = vmatpush2.bf16.msra.mxu0 0
    %477 = vmatprep.subr.bf16.mxu0 0
    %478 = vmatpush2.bf16.msra.mxu0 0
    %479 = vmatprep.subr.bf16.mxu0 0
    %480 = vmatpush2.bf16.msra.mxu0 0
    %481 = vmatprep.subr.bf16.mxu0 0
    %482 = vmatpush2.bf16.msra.mxu0 0
    %483 = vmatprep.subr.bf16.mxu0 0
    %484 = vmatpush2.bf16.msra.mxu0 0
    %485 = vmatprep.mubr.bf16.mxu0 0
    %486 = vmatmul.mubr.bf16.gmra.mxu0 %v448
    %v487 = vpop.f32.mrf.mxu0
    %v488 = vadd.f32 0.0, %v487
    %v489 = vpop.f32.mrf.mxu0
    %v490 = vpop.f32.mrf.mxu0
    %v491 = vpop.f32.mrf.mxu0
    %492 = vdwg.mxu0
    %v493 = vpack.c.bf16 %v488, %v488
    %v495 = vsel %vm225, %v493, 0
    %v498 = vsel %vm290, %v31, 0
    %500 = vmatprep.subr.bf16.mxu0 0
    %501 = vmatpush1.bf16.msra.mxu0 0
    %502 = vmatprep.subr.bf16.mxu0 0
    %503 = vmatpush1.bf16.msra.mxu0 0
    %504 = vmatprep.subr.bf16.mxu0 0
    %505 = vmatpush1.bf16.msra.mxu0 0
    %506 = vmatprep.subr.bf16.mxu0 0
    %507 = vmatpush1.bf16.msra.mxu0 0
    %508 = vmatprep.subr.bf16.mxu0 0
    %509 = vmatpush1.bf16.msra.mxu0 0
    %510 = vmatprep.subr.bf16.mxu0 0
    %511 = vmatpush1.bf16.msra.mxu0 0
    %512 = vmatprep.subr.bf16.mxu0 0
    %513 = vmatpush1.bf16.msra.mxu0 0
    %514 = vmatprep.subr.bf16.mxu0 0
    %515 = vmatpush1.bf16.msra.mxu0 %v498
    %516 = vmatprep.subr.bf16.mxu0 0
    %517 = vmatpush2.bf16.msra.mxu0 0
    %518 = vmatprep.subr.bf16.mxu0 0
    %519 = vmatpush2.bf16.msra.mxu0 0
    %520 = vmatprep.subr.bf16.mxu0 0
    %521 = vmatpush2.bf16.msra.mxu0 0
    %522 = vmatprep.subr.bf16.mxu0 0
    %523 = vmatpush2.bf16.msra.mxu0 0
    %524 = vmatprep.subr.bf16.mxu0 0
    %525 = vmatpush2.bf16.msra.mxu0 0
    %526 = vmatprep.subr.bf16.mxu0 0
    %527 = vmatpush2.bf16.msra.mxu0 0
    %528 = vmatprep.subr.bf16.mxu0 0
    %529 = vmatpush2.bf16.msra.mxu0 0
    %530 = vmatprep.subr.bf16.mxu0 0
    %531 = vmatpush2.bf16.msra.mxu0 0
    %532 = vmatprep.mubr.bf16.mxu0 0
    %533 = vmatmul.mubr.bf16.gmra.mxu0 %v495
    %v534 = vpop.f32.mrf.mxu0
    %v535 = vadd.f32 0.0, %v534
    %v536 = vpop.f32.mrf.mxu0
    %v537 = vpop.f32.mrf.mxu0
    %v538 = vpop.f32.mrf.mxu0
    %539 = vdwg.mxu0
    %v540 = vadd.f32 %v381, %v535
    %541 = vrot.lane.b32.xlu0 %v106, 112
    %v542 = vpop.permute.xlu0 %541
    %543 = vrot.lane.b32.xlu0 %v167, 112
    %v544 = vpop.permute.xlu0 %543
    %v546 = vsel %vm225, %v542, 0
    %v549 = vsel %vm225, %v544, 0
    %551 = vmatprep.subr.bf16.mxu0 0
    %552 = vmatpush1.bf16.xpose.msra.mxu0 0
    %553 = vmatprep.subr.bf16.mxu0 0
    %554 = vmatpush1.bf16.xpose.msra.mxu0 0
    %555 = vmatprep.subr.bf16.mxu0 0
    %556 = vmatpush1.bf16.xpose.msra.mxu0 0
    %557 = vmatprep.subr.bf16.mxu0 0
    %558 = vmatpush1.bf16.xpose.msra.mxu0 0
    %559 = vmatprep.subr.bf16.mxu0 0
    %560 = vmatpush1.bf16.xpose.msra.mxu0 0
    %561 = vmatprep.subr.bf16.mxu0 0
    %562 = vmatpush1.bf16.xpose.msra.mxu0 0
    %563 = vmatprep.subr.bf16.mxu0 0
    %564 = vmatpush1.bf16.xpose.msra.mxu0 0
    %565 = vmatprep.subr.bf16.mxu0 0
    %566 = vmatpush1.bf16.xpose.msra.mxu0 %v549
    %567 = vmatprep.subr.bf16.mxu0 0
    %568 = vmatpush2.bf16.xpose.msra.mxu0 0
    %569 = vmatprep.subr.bf16.mxu0 0
    %570 = vmatpush2.bf16.xpose.msra.mxu0 0
    %571 = vmatprep.subr.bf16.mxu0 0
    %572 = vmatpush2.bf16.xpose.msra.mxu0 0
    %573 = vmatprep.subr.bf16.mxu0 0
    %574 = vmatpush2.bf16.xpose.msra.mxu0 0
    %575 = vmatprep.subr.bf16.mxu0 0
    %576 = vmatpush2.bf16.xpose.msra.mxu0 0
    %577 = vmatprep.subr.bf16.mxu0 0
    %578 = vmatpush2.bf16.xpose.msra.mxu0 0
    %579 = vmatprep.subr.bf16.mxu0 0
    %580 = vmatpush2.bf16.xpose.msra.mxu0 0
    %581 = vmatprep.subr.bf16.mxu0 0
    %582 = vmatpush2.bf16.xpose.msra.mxu0 0
    %583 = vmatprep.mubr.bf16.mxu0 0
    %584 = vmatmul.mubr.bf16.gmra.mxu0 %v546
    %v585 = vpop.f32.mrf.mxu0
    %v586 = vadd.f32 0.0, %v585
    %v587 = vpop.f32.mrf.mxu0
    %v588 = vpop.f32.mrf.mxu0
    %v589 = vpop.f32.mrf.mxu0
    %590 = vdwg.mxu0
    %v591 = vsel %vm225, %v586, -inf
    %592 = vmax.xlane.f32.xlu0 %v591
    %v593 = vpop.xlane.xlu0 %592
    %v594 = vsub.f32 %v586, %v593
    %v595 = vmul.f32 %v594, 1.442695
    %v596 = vpow.pop %v595
    %v597 = vsel %vm225, %v596, 0.0
    %598 = vadd.xlane.f32.xlu0 %v597
    %v599 = vpop.xlane.xlu0 %598
    %v600 = vrcp.pop %v599
    %v601 = vmul.f32 %v596, %v600
    %v602 = vpack.c.bf16 %v601, %v601
    %603 = vrot.lane.b32.xlu0 %v167, 80
    %v604 = vpop.permute.xlu0 %603
    %v606 = vsel %vm225, %v602, 0
    %v609 = vsel %vm290, %v604, 0
    %611 = vmatprep.subr.bf16.mxu0 0
    %612 = vmatpush1.bf16.msra.mxu0 0
    %613 = vmatprep.subr.bf16.mxu0 0
    %614 = vmatpush1.bf16.msra.mxu0 0
    %615 = vmatprep.subr.bf16.mxu0 0
    %616 = vmatpush1.bf16.msra.mxu0 0
    %617 = vmatprep.subr.bf16.mxu0 0
    %618 = vmatpush1.bf16.msra.mxu0 0
    %619 = vmatprep.subr.bf16.mxu0 0
    %620 = vmatpush1.bf16.msra.mxu0 0
    %621 = vmatprep.subr.bf16.mxu0 0
    %622 = vmatpush1.bf16.msra.mxu0 0
    %623 = vmatprep.subr.bf16.mxu0 0
    %624 = vmatpush1.bf16.msra.mxu0 0
    %625 = vmatprep.subr.bf16.mxu0 0
    %626 = vmatpush1.bf16.msra.mxu0 %v609
    %627 = vmatprep.subr.bf16.mxu0 0
    %628 = vmatpush2.bf16.msra.mxu0 0
    %629 = vmatprep.subr.bf16.mxu0 0
    %630 = vmatpush2.bf16.msra.mxu0 0
    %631 = vmatprep.subr.bf16.mxu0 0
    %632 = vmatpush2.bf16.msra.mxu0 0
    %633 = vmatprep.subr.bf16.mxu0 0
    %634 = vmatpush2.bf16.msra.mxu0 0
    %635 = vmatprep.subr.bf16.mxu0 0
    %636 = vmatpush2.bf16.msra.mxu0 0
    %637 = vmatprep.subr.bf16.mxu0 0
    %638 = vmatpush2.bf16.msra.mxu0 0
    %639 = vmatprep.subr.bf16.mxu0 0
    %640 = vmatpush2.bf16.msra.mxu0 0
    %641 = vmatprep.subr.bf16.mxu0 0
    %642 = vmatpush2.bf16.msra.mxu0 0
    %643 = vmatprep.mubr.bf16.mxu0 0
    %644 = vmatmul.mubr.bf16.gmra.mxu0 %v606
    %v645 = vpop.f32.mrf.mxu0
    %v646 = vadd.f32 0.0, %v645
    %v647 = vpop.f32.mrf.mxu0
    %v648 = vpop.f32.mrf.mxu0
    %v649 = vpop.f32.mrf.mxu0
    %650 = vdwg.mxu0
    %v651 = vpack.c.bf16 %v646, %v646
    %v653 = vsel %vm225, %v651, 0
    %v656 = vsel %vm290, %v32, 0
    %658 = vmatprep.subr.bf16.mxu0 0
    %659 = vmatpush1.bf16.msra.mxu0 0
    %660 = vmatprep.subr.bf16.mxu0 0
    %661 = vmatpush1.bf16.msra.mxu0 0
    %662 = vmatprep.subr.bf16.mxu0 0
    %663 = vmatpush1.bf16.msra.mxu0 0
    %664 = vmatprep.subr.bf16.mxu0 0
    %665 = vmatpush1.bf16.msra.mxu0 0
    %666 = vmatprep.subr.bf16.mxu0 0
    %667 = vmatpush1.bf16.msra.mxu0 0
    %668 = vmatprep.subr.bf16.mxu0 0
    %669 = vmatpush1.bf16.msra.mxu0 0
    %670 = vmatprep.subr.bf16.mxu0 0
    %671 = vmatpush1.bf16.msra.mxu0 0
    %672 = vmatprep.subr.bf16.mxu0 0
    %673 = vmatpush1.bf16.msra.mxu0 %v656
    %674 = vmatprep.subr.bf16.mxu0 0
    %675 = vmatpush2.bf16.msra.mxu0 0
    %676 = vmatprep.subr.bf16.mxu0 0
    %677 = vmatpush2.bf16.msra.mxu0 0
    %678 = vmatprep.subr.bf16.mxu0 0
    %679 = vmatpush2.bf16.msra.mxu0 0
    %680 = vmatprep.subr.bf16.mxu0 0
    %681 = vmatpush2.bf16.msra.mxu0 0
    %682 = vmatprep.subr.bf16.mxu0 0
    %683 = vmatpush2.bf16.msra.mxu0 0
    %684 = vmatprep.subr.bf16.mxu0 0
    %685 = vmatpush2.bf16.msra.mxu0 0
    %686 = vmatprep.subr.bf16.mxu0 0
    %687 = vmatpush2.bf16.msra.mxu0 0
    %688 = vmatprep.subr.bf16.mxu0 0
    %689 = vmatpush2.bf16.msra.mxu0 0
    %690 = vmatprep.mubr.bf16.mxu0 0
    %691 = vmatmul.mubr.bf16.gmra.mxu0 %v653
    %v692 = vpop.f32.mrf.mxu0
    %v693 = vadd.f32 0.0, %v692
    %v694 = vpop.f32.mrf.mxu0
    %v695 = vpop.f32.mrf.mxu0
    %v696 = vpop.f32.mrf.mxu0
    %697 = vdwg.mxu0
    %v698 = vadd.f32 %v540, %v693
    %699 = vrot.lane.b32.xlu0 %v106, 104
    %v700 = vpop.permute.xlu0 %699
    %701 = vrot.lane.b32.xlu0 %v167, 104
    %v702 = vpop.permute.xlu0 %701
    %v704 = vsel %vm225, %v700, 0
    %v707 = vsel %vm225, %v702, 0
    %709 = vmatprep.subr.bf16.mxu0 0
    %710 = vmatpush1.bf16.xpose.msra.mxu0 0
    %711 = vmatprep.subr.bf16.mxu0 0
    %712 = vmatpush1.bf16.xpose.msra.mxu0 0
    %713 = vmatprep.subr.bf16.mxu0 0
    %714 = vmatpush1.bf16.xpose.msra.mxu0 0
    %715 = vmatprep.subr.bf16.mxu0 0
    %716 = vmatpush1.bf16.xpose.msra.mxu0 0
    %717 = vmatprep.subr.bf16.mxu0 0
    %718 = vmatpush1.bf16.xpose.msra.mxu0 0
    %719 = vmatprep.subr.bf16.mxu0 0
    %720 = vmatpush1.bf16.xpose.msra.mxu0 0
    %721 = vmatprep.subr.bf16.mxu0 0
    %722 = vmatpush1.bf16.xpose.msra.mxu0 0
    %723 = vmatprep.subr.bf16.mxu0 0
    %724 = vmatpush1.bf16.xpose.msra.mxu0 %v707
    %725 = vmatprep.subr.bf16.mxu0 0
    %726 = vmatpush2.bf16.xpose.msra.mxu0 0
    %727 = vmatprep.subr.bf16.mxu0 0
    %728 = vmatpush2.bf16.xpose.msra.mxu0 0
    %729 = vmatprep.subr.bf16.mxu0 0
    %730 = vmatpush2.bf16.xpose.msra.mxu0 0
    %731 = vmatprep.subr.bf16.mxu0 0
    %732 = vmatpush2.bf16.xpose.msra.mxu0 0
    %733 = vmatprep.subr.bf16.mxu0 0
    %734 = vmatpush2.bf16.xpose.msra.mxu0 0
    %735 = vmatprep.subr.bf16.mxu0 0
    %736 = vmatpush2.bf16.xpose.msra.mxu0 0
    %737 = vmatprep.subr.bf16.mxu0 0
    %738 = vmatpush2.bf16.xpose.msra.mxu0 0
    %739 = vmatprep.subr.bf16.mxu0 0
    %740 = vmatpush2.bf16.xpose.msra.mxu0 0
    %741 = vmatprep.mubr.bf16.mxu0 0
    %742 = vmatmul.mubr.bf16.gmra.mxu0 %v704
    %v743 = vpop.f32.mrf.mxu0
    %v744 = vadd.f32 0.0, %v743
    %v745 = vpop.f32.mrf.mxu0
    %v746 = vpop.f32.mrf.mxu0
    %v747 = vpop.f32.mrf.mxu0
    %748 = vdwg.mxu0
    %v749 = vsel %vm225, %v744, -inf
    %750 = vmax.xlane.f32.xlu0 %v749
    %v751 = vpop.xlane.xlu0 %750
    %v752 = vsub.f32 %v744, %v751
    %v753 = vmul.f32 %v752, 1.442695
    %v754 = vpow.pop %v753
    %v755 = vsel %vm225, %v754, 0.0
    %756 = vadd.xlane.f32.xlu0 %v755
    %v757 = vpop.xlane.xlu0 %756
    %v758 = vrcp.pop %v757
    %v759 = vmul.f32 %v754, %v758
    %v760 = vpack.c.bf16 %v759, %v759
    %761 = vrot.lane.b32.xlu0 %v167, 72
    %v762 = vpop.permute.xlu0 %761
    %v764 = vsel %vm225, %v760, 0
    %v767 = vsel %vm290, %v762, 0
    %769 = vmatprep.subr.bf16.mxu0 0
    %770 = vmatpush1.bf16.msra.mxu0 0
    %771 = vmatprep.subr.bf16.mxu0 0
    %772 = vmatpush1.bf16.msra.mxu0 0
    %773 = vmatprep.subr.bf16.mxu0 0
    %774 = vmatpush1.bf16.msra.mxu0 0
    %775 = vmatprep.subr.bf16.mxu0 0
    %776 = vmatpush1.bf16.msra.mxu0 0
    %777 = vmatprep.subr.bf16.mxu0 0
    %778 = vmatpush1.bf16.msra.mxu0 0
    %779 = vmatprep.subr.bf16.mxu0 0
    %780 = vmatpush1.bf16.msra.mxu0 0
    %781 = vmatprep.subr.bf16.mxu0 0
    %782 = vmatpush1.bf16.msra.mxu0 0
    %783 = vmatprep.subr.bf16.mxu0 0
    %784 = vmatpush1.bf16.msra.mxu0 %v767
    %785 = vmatprep.subr.bf16.mxu0 0
    %786 = vmatpush2.bf16.msra.mxu0 0
    %787 = vmatprep.subr.bf16.mxu0 0
    %788 = vmatpush2.bf16.msra.mxu0 0
    %789 = vmatprep.subr.bf16.mxu0 0
    %790 = vmatpush2.bf16.msra.mxu0 0
    %791 = vmatprep.subr.bf16.mxu0 0
    %792 = vmatpush2.bf16.msra.mxu0 0
    %793 = vmatprep.subr.bf16.mxu0 0
    %794 = vmatpush2.bf16.msra.mxu0 0
    %795 = vmatprep.subr.bf16.mxu0 0
    %796 = vmatpush2.bf16.msra.mxu0 0
    %797 = vmatprep.subr.bf16.mxu0 0
    %798 = vmatpush2.bf16.msra.mxu0 0
    %799 = vmatprep.subr.bf16.mxu0 0
    %800 = vmatpush2.bf16.msra.mxu0 0
    %801 = vmatprep.mubr.bf16.mxu0 0
    %802 = vmatmul.mubr.bf16.gmra.mxu0 %v764
    %v803 = vpop.f32.mrf.mxu0
    %v804 = vadd.f32 0.0, %v803
    %v805 = vpop.f32.mrf.mxu0
    %v806 = vpop.f32.mrf.mxu0
    %v807 = vpop.f32.mrf.mxu0
    %808 = vdwg.mxu0
    %v809 = vpack.c.bf16 %v804, %v804
    %v811 = vsel %vm225, %v809, 0
    %v814 = vsel %vm290, %v33, 0
    %816 = vmatprep.subr.bf16.mxu0 0
    %817 = vmatpush1.bf16.msra.mxu0 0
    %818 = vmatprep.subr.bf16.mxu0 0
    %819 = vmatpush1.bf16.msra.mxu0 0
    %820 = vmatprep.subr.bf16.mxu0 0
    %821 = vmatpush1.bf16.msra.mxu0 0
    %822 = vmatprep.subr.bf16.mxu0 0
    %823 = vmatpush1.bf16.msra.mxu0 0
    %824 = vmatprep.subr.bf16.mxu0 0
    %825 = vmatpush1.bf16.msra.mxu0 0
    %826 = vmatprep.subr.bf16.mxu0 0
    %827 = vmatpush1.bf16.msra.mxu0 0
    %828 = vmatprep.subr.bf16.mxu0 0
    %829 = vmatpush1.bf16.msra.mxu0 0
    %830 = vmatprep.subr.bf16.mxu0 0
    %831 = vmatpush1.bf16.msra.mxu0 %v814
    %832 = vmatprep.subr.bf16.mxu0 0
    %833 = vmatpush2.bf16.msra.mxu0 0
    %834 = vmatprep.subr.bf16.mxu0 0
    %835 = vmatpush2.bf16.msra.mxu0 0
    %836 = vmatprep.subr.bf16.mxu0 0
    %837 = vmatpush2.bf16.msra.mxu0 0
    %838 = vmatprep.subr.bf16.mxu0 0
    %839 = vmatpush2.bf16.msra.mxu0 0
    %840 = vmatprep.subr.bf16.mxu0 0
    %841 = vmatpush2.bf16.msra.mxu0 0
    %842 = vmatprep.subr.bf16.mxu0 0
    %843 = vmatpush2.bf16.msra.mxu0 0
    %844 = vmatprep.subr.bf16.mxu0 0
    %845 = vmatpush2.bf16.msra.mxu0 0
    %846 = vmatprep.subr.bf16.mxu0 0
    %847 = vmatpush2.bf16.msra.mxu0 0
    %848 = vmatprep.mubr.bf16.mxu0 0
    %849 = vmatmul.mubr.bf16.gmra.mxu0 %v811
    %v850 = vpop.f32.mrf.mxu0
    %v851 = vadd.f32 0.0, %v850
    %v852 = vpop.f32.mrf.mxu0
    %v853 = vpop.f32.mrf.mxu0
    %v854 = vpop.f32.mrf.mxu0
    %855 = vdwg.mxu0
    %v856 = vadd.f32 %v698, %v851
    %vm857 = vcmask 523264
    %858 = vst.msk [vmem:[#allocation2] sm:$0xff] %vm857, %v856
    %v859 = vrot.slane %v106, 4
    %v860 = vrot.slane %v167, 4
    %v862 = vsel %vm225, %v859, 0
    %v865 = vsel %vm225, %v860, 0
    %867 = vmatprep.subr.bf16.mxu0 0
    %868 = vmatpush1.bf16.xpose.msra.mxu0 0
    %869 = vmatprep.subr.bf16.mxu0 0
    %870 = vmatpush1.bf16.xpose.msra.mxu0 0
    %871 = vmatprep.subr.bf16.mxu0 0
    %872 = vmatpush1.bf16.xpose.msra.mxu0 0
    %873 = vmatprep.subr.bf16.mxu0 0
    %874 = vmatpush1.bf16.xpose.msra.mxu0 0
    %875 = vmatprep.subr.bf16.mxu0 0
    %876 = vmatpush1.bf16.xpose.msra.mxu0 0
    %877 = vmatprep.subr.bf16.mxu0 0
    %878 = vmatpush1.bf16.xpose.msra.mxu0 0
    %879 = vmatprep.subr.bf16.mxu0 0
    %880 = vmatpush1.bf16.xpose.msra.mxu0 0
    %881 = vmatprep.subr.bf16.mxu0 0
    %882 = vmatpush1.bf16.xpose.msra.mxu0 %v865
    %883 = vmatprep.subr.bf16.mxu0 0
    %884 = vmatpush2.bf16.xpose.msra.mxu0 0
    %885 = vmatprep.subr.bf16.mxu0 0
    %886 = vmatpush2.bf16.xpose.msra.mxu0 0
    %887 = vmatprep.subr.bf16.mxu0 0
    %888 = vmatpush2.bf16.xpose.msra.mxu0 0
    %889 = vmatprep.subr.bf16.mxu0 0
    %890 = vmatpush2.bf16.xpose.msra.mxu0 0
    %891 = vmatprep.subr.bf16.mxu0 0
    %892 = vmatpush2.bf16.xpose.msra.mxu0 0
    %893 = vmatprep.subr.bf16.mxu0 0
    %894 = vmatpush2.bf16.xpose.msra.mxu0 0
    %895 = vmatprep.subr.bf16.mxu0 0
    %896 = vmatpush2.bf16.xpose.msra.mxu0 0
    %897 = vmatprep.subr.bf16.mxu0 0
    %898 = vmatpush2.bf16.xpose.msra.mxu0 0
    %899 = vmatprep.mubr.bf16.mxu0 0
    %900 = vmatmul.mubr.bf16.gmra.mxu0 %v862
    %v901 = vpop.f32.mrf.mxu0
    %v902 = vadd.f32 0.0, %v901
    %v903 = vpop.f32.mrf.mxu0
    %v904 = vpop.f32.mrf.mxu0
    %v905 = vpop.f32.mrf.mxu0
    %906 = vdwg.mxu0
    %v907 = vsel %vm225, %v902, -inf
    %908 = vmax.xlane.f32.xlu0 %v907
    %v909 = vpop.xlane.xlu0 %908
    %v910 = vsub.f32 %v902, %v909
    %v911 = vmul.f32 %v910, 1.442695
    %v912 = vpow.pop %v911
    %v913 = vsel %vm225, %v912, 0.0
    %914 = vadd.xlane.f32.xlu0 %v913
    %v915 = vpop.xlane.xlu0 %914
    %v916 = vrcp.pop %v915
    %v917 = vmul.f32 %v912, %v916
    %v918 = vpack.c.bf16 %v917, %v917
    %919 = vrot.lane.b32.xlu0 %v860, 96
    %v920 = vpop.permute.xlu0 %919
    %v922 = vsel %vm225, %v918, 0
    %v925 = vsel %vm290, %v920, 0
    %927 = vmatprep.subr.bf16.mxu0 0
    %928 = vmatpush1.bf16.msra.mxu0 0
    %929 = vmatprep.subr.bf16.mxu0 0
    %930 = vmatpush1.bf16.msra.mxu0 0
    %931 = vmatprep.subr.bf16.mxu0 0
    %932 = vmatpush1.bf16.msra.mxu0 0
    %933 = vmatprep.subr.bf16.mxu0 0
    %934 = vmatpush1.bf16.msra.mxu0 0
    %935 = vmatprep.subr.bf16.mxu0 0
    %936 = vmatpush1.bf16.msra.mxu0 0
    %937 = vmatprep.subr.bf16.mxu0 0
    %938 = vmatpush1.bf16.msra.mxu0 0
    %939 = vmatprep.subr.bf16.mxu0 0
    %940 = vmatpush1.bf16.msra.mxu0 0
    %941 = vmatprep.subr.bf16.mxu0 0
    %942 = vmatpush1.bf16.msra.mxu0 %v925
    %943 = vmatprep.subr.bf16.mxu0 0
    %944 = vmatpush2.bf16.msra.mxu0 0
    %945 = vmatprep.subr.bf16.mxu0 0
    %946 = vmatpush2.bf16.msra.mxu0 0
    %947 = vmatprep.subr.bf16.mxu0 0
    %948 = vmatpush2.bf16.msra.mxu0 0
    %949 = vmatprep.subr.bf16.mxu0 0
    %950 = vmatpush2.bf16.msra.mxu0 0
    %951 = vmatprep.subr.bf16.mxu0 0
    %952 = vmatpush2.bf16.msra.mxu0 0
    %953 = vmatprep.subr.bf16.mxu0 0
    %954 = vmatpush2.bf16.msra.mxu0 0
    %955 = vmatprep.subr.bf16.mxu0 0
    %956 = vmatpush2.bf16.msra.mxu0 0
    %957 = vmatprep.subr.bf16.mxu0 0
    %958 = vmatpush2.bf16.msra.mxu0 0
    %959 = vmatprep.mubr.bf16.mxu0 0
    %960 = vmatmul.mubr.bf16.gmra.mxu0 %v922
    %v961 = vpop.f32.mrf.mxu0
    %v962 = vadd.f32 0.0, %v961
    %v963 = vpop.f32.mrf.mxu0
    %v964 = vpop.f32.mrf.mxu0
    %v965 = vpop.f32.mrf.mxu0
    %966 = vdwg.mxu0
    %v967 = vpack.c.bf16 %v962, %v962
    %v969 = vsel %vm225, %v967, 0
    %971 = vmatprep.subr.bf16.mxu0 0
    %972 = vmatpush1.bf16.msra.mxu0 0
    %973 = vmatprep.subr.bf16.mxu0 0
    %974 = vmatpush1.bf16.msra.mxu0 0
    %975 = vmatprep.subr.bf16.mxu0 0
    %976 = vmatpush1.bf16.msra.mxu0 0
    %977 = vmatprep.subr.bf16.mxu0 0
    %978 = vmatpush1.bf16.msra.mxu0 0
    %979 = vmatprep.subr.bf16.mxu0 0
    %980 = vmatpush1.bf16.msra.mxu0 0
    %981 = vmatprep.subr.bf16.mxu0 0
    %982 = vmatpush1.bf16.msra.mxu0 0
    %983 = vmatprep.subr.bf16.mxu0 0
    %984 = vmatpush1.bf16.msra.mxu0 0
    %985 = vmatprep.subr.bf16.mxu0 0
    %986 = vmatpush1.bf16.msra.mxu0 %v339
    %987 = vmatprep.subr.bf16.mxu0 0
    %988 = vmatpush2.bf16.msra.mxu0 0
    %989 = vmatprep.subr.bf16.mxu0 0
    %990 = vmatpush2.bf16.msra.mxu0 0
    %991 = vmatprep.subr.bf16.mxu0 0
    %992 = vmatpush2.bf16.msra.mxu0 0
    %993 = vmatprep.subr.bf16.mxu0 0
    %994 = vmatpush2.bf16.msra.mxu0 0
    %995 = vmatprep.subr.bf16.mxu0 0
    %996 = vmatpush2.bf16.msra.mxu0 0
    %997 = vmatprep.subr.bf16.mxu0 0
    %998 = vmatpush2.bf16.msra.mxu0 0
    %999 = vmatprep.subr.bf16.mxu0 0
    %1000 = vmatpush2.bf16.msra.mxu0 0
    %1001 = vmatprep.subr.bf16.mxu0 0
    %1002 = vmatpush2.bf16.msra.mxu0 0
    %1003 = vmatprep.mubr.bf16.mxu0 0
    %1004 = vmatmul.mubr.bf16.gmra.mxu0 %v969
    %v1005 = vpop.f32.mrf.mxu0
    %v1006 = vadd.f32 0.0, %v1005
    %v1007 = vpop.f32.mrf.mxu0
    %v1008 = vpop.f32.mrf.mxu0
    %v1009 = vpop.f32.mrf.mxu0
    %1010 = vdwg.mxu0
    %v1011 = vadd.f32 %v222, %v1006
    %1012 = vrot.lane.b32.xlu0 %v859, 120
    %v1013 = vpop.permute.xlu0 %1012
    %1014 = vrot.lane.b32.xlu0 %v860, 120
    %v1015 = vpop.permute.xlu0 %1014
    %v1017 = vsel %vm225, %v1013, 0
    %v1020 = vsel %vm225, %v1015, 0
    %1022 = vmatprep.subr.bf16.mxu0 0
    %1023 = vmatpush1.bf16.xpose.msra.mxu0 0
    %1024 = vmatprep.subr.bf16.mxu0 0
    %1025 = vmatpush1.bf16.xpose.msra.mxu0 0
    %1026 = vmatprep.subr.bf16.mxu0 0
    %1027 = vmatpush1.bf16.xpose.msra.mxu0 0
    %1028 = vmatprep.subr.bf16.mxu0 0
    %1029 = vmatpush1.bf16.xpose.msra.mxu0 0
    %1030 = vmatprep.subr.bf16.mxu0 0
    %1031 = vmatpush1.bf16.xpose.msra.mxu0 0
    %1032 = vmatprep.subr.bf16.mxu0 0
    %1033 = vmatpush1.bf16.xpose.msra.mxu0 0
    %1034 = vmatprep.subr.bf16.mxu0 0
    %1035 = vmatpush1.bf16.xpose.msra.mxu0 0
    %1036 = vmatprep.subr.bf16.mxu0 0
    %1037 = vmatpush1.bf16.xpose.msra.mxu0 %v1020
    %1038 = vmatprep.subr.bf16.mxu0 0
    %1039 = vmatpush2.bf16.xpose.msra.mxu0 0
    %1040 = vmatprep.subr.bf16.mxu0 0
    %1041 = vmatpush2.bf16.xpose.msra.mxu0 0
    %1042 = vmatprep.subr.bf16.mxu0 0
    %1043 = vmatpush2.bf16.xpose.msra.mxu0 0
    %1044 = vmatprep.subr.bf16.mxu0 0
    %1045 = vmatpush2.bf16.xpose.msra.mxu0 0
    %1046 = vmatprep.subr.bf16.mxu0 0
    %1047 = vmatpush2.bf16.xpose.msra.mxu0 0
    %1048 = vmatprep.subr.bf16.mxu0 0
    %1049 = vmatpush2.bf16.xpose.msra.mxu0 0
    %1050 = vmatprep.subr.bf16.mxu0 0
    %1051 = vmatpush2.bf16.xpose.msra.mxu0 0
    %1052 = vmatprep.subr.bf16.mxu0 0
    %1053 = vmatpush2.bf16.xpose.msra.mxu0 0
    %1054 = vmatprep.mubr.bf16.mxu0 0
    %1055 = vmatmul.mubr.bf16.gmra.mxu0 %v1017
    %v1056 = vpop.f32.mrf.mxu0
    %v1057 = vadd.f32 0.0, %v1056
    %v1058 = vpop.f32.mrf.mxu0
    %v1059 = vpop.f32.mrf.mxu0
    %v1060 = vpop.f32.mrf.mxu0
    %1061 = vdwg.mxu0
    %v1062 = vsel %vm225, %v1057, -inf
    %1063 = vmax.xlane.f32.xlu0 %v1062
    %v1064 = vpop.xlane.xlu0 %1063
    %v1065 = vsub.f32 %v1057, %v1064
    %v1066 = vmul.f32 %v1065, 1.442695
    %v1067 = vpow.pop %v1066
    %v1068 = vsel %vm225, %v1067, 0.0
    %1069 = vadd.xlane.f32.xlu0 %v1068
    %v1070 = vpop.xlane.xlu0 %1069
    %v1071 = vrcp.pop %v1070
    %v1072 = vmul.f32 %v1067, %v1071
    %v1073 = vpack.c.bf16 %v1072, %v1072
    %1074 = vrot.lane.b32.xlu0 %v860, 88
    %v1075 = vpop.permute.xlu0 %1074
    %v1077 = vsel %vm225, %v1073, 0
    %v1080 = vsel %vm290, %v1075, 0
    %1082 = vmatprep.subr.bf16.mxu0 0
    %1083 = vmatpush1.bf16.msra.mxu0 0
    %1084 = vmatprep.subr.bf16.mxu0 0
    %1085 = vmatpush1.bf16.msra.mxu0 0
    %1086 = vmatprep.subr.bf16.mxu0 0
    %1087 = vmatpush1.bf16.msra.mxu0 0
    %1088 = vmatprep.subr.bf16.mxu0 0
    %1089 = vmatpush1.bf16.msra.mxu0 0
    %1090 = vmatprep.subr.bf16.mxu0 0
    %1091 = vmatpush1.bf16.msra.mxu0 0
    %1092 = vmatprep.subr.bf16.mxu0 0
    %1093 = vmatpush1.bf16.msra.mxu0 0
    %1094 = vmatprep.subr.bf16.mxu0 0
    %1095 = vmatpush1.bf16.msra.mxu0 0
    %1096 = vmatprep.subr.bf16.mxu0 0
    %1097 = vmatpush1.bf16.msra.mxu0 %v1080
    %1098 = vmatprep.subr.bf16.mxu0 0
    %1099 = vmatpush2.bf16.msra.mxu0 0
    %1100 = vmatprep.subr.bf16.mxu0 0
    %1101 = vmatpush2.bf16.msra.mxu0 0
    %1102 = vmatprep.subr.bf16.mxu0 0
    %1103 = vmatpush2.bf16.msra.mxu0 0
    %1104 = vmatprep.subr.bf16.mxu0 0
    %1105 = vmatpush2.bf16.msra.mxu0 0
    %1106 = vmatprep.subr.bf16.mxu0 0
    %1107 = vmatpush2.bf16.msra.mxu0 0
    %1108 = vmatprep.subr.bf16.mxu0 0
    %1109 = vmatpush2.bf16.msra.mxu0 0
    %1110 = vmatprep.subr.bf16.mxu0 0
    %1111 = vmatpush2.bf16.msra.mxu0 0
    %1112 = vmatprep.subr.bf16.mxu0 0
    %1113 = vmatpush2.bf16.msra.mxu0 0
    %1114 = vmatprep.mubr.bf16.mxu0 0
    %1115 = vmatmul.mubr.bf16.gmra.mxu0 %v1077
    %v1116 = vpop.f32.mrf.mxu0
    %v1117 = vadd.f32 0.0, %v1116
    %v1118 = vpop.f32.mrf.mxu0
    %v1119 = vpop.f32.mrf.mxu0
    %v1120 = vpop.f32.mrf.mxu0
    %1121 = vdwg.mxu0
    %v1122 = vpack.c.bf16 %v1117, %v1117
    %v1124 = vsel %vm225, %v1122, 0
    %1126 = vmatprep.subr.bf16.mxu0 0
    %1127 = vmatpush1.bf16.msra.mxu0 0
    %1128 = vmatprep.subr.bf16.mxu0 0
    %1129 = vmatpush1.bf16.msra.mxu0 0
    %1130 = vmatprep.subr.bf16.mxu0 0
    %1131 = vmatpush1.bf16.msra.mxu0 0
    %1132 = vmatprep.subr.bf16.mxu0 0
    %1133 = vmatpush1.bf16.msra.mxu0 0
    %1134 = vmatprep.subr.bf16.mxu0 0
    %1135 = vmatpush1.bf16.msra.mxu0 0
    %1136 = vmatprep.subr.bf16.mxu0 0
    %1137 = vmatpush1.bf16.msra.mxu0 0
    %1138 = vmatprep.subr.bf16.mxu0 0
    %1139 = vmatpush1.bf16.msra.mxu0 0
    %1140 = vmatprep.subr.bf16.mxu0 0
    %1141 = vmatpush1.bf16.msra.mxu0 %v498
    %1142 = vmatprep.subr.bf16.mxu0 0
    %1143 = vmatpush2.bf16.msra.mxu0 0
    %1144 = vmatprep.subr.bf16.mxu0 0
    %1145 = vmatpush2.bf16.msra.mxu0 0
    %1146 = vmatprep.subr.bf16.mxu0 0
    %1147 = vmatpush2.bf16.msra.mxu0 0
    %1148 = vmatprep.subr.bf16.mxu0 0
    %1149 = vmatpush2.bf16.msra.mxu0 0
    %1150 = vmatprep.subr.bf16.mxu0 0
    %1151 = vmatpush2.bf16.msra.mxu0 0
    %1152 = vmatprep.subr.bf16.mxu0 0
    %1153 = vmatpush2.bf16.msra.mxu0 0
    %1154 = vmatprep.subr.bf16.mxu0 0
    %1155 = vmatpush2.bf16.msra.mxu0 0
    %1156 = vmatprep.subr.bf16.mxu0 0
    %1157 = vmatpush2.bf16.msra.mxu0 0
    %1158 = vmatprep.mubr.bf16.mxu0 0
    %1159 = vmatmul.mubr.bf16.gmra.mxu0 %v1124
    %v1160 = vpop.f32.mrf.mxu0
    %v1161 = vadd.f32 0.0, %v1160
    %v1162 = vpop.f32.mrf.mxu0
    %v1163 = vpop.f32.mrf.mxu0
    %v1164 = vpop.f32.mrf.mxu0
    %1165 = vdwg.mxu0
    %v1166 = vadd.f32 %v1011, %v1161
    %1167 = vrot.lane.b32.xlu0 %v859, 112
    %v1168 = vpop.permute.xlu0 %1167
    %1169 = vrot.lane.b32.xlu0 %v860, 112
    %v1170 = vpop.permute.xlu0 %1169
    %v1172 = vsel %vm225, %v1168, 0
    %v1175 = vsel %vm225, %v1170, 0
    %1177 = vmatprep.subr.bf16.mxu0 0
    %1178 = vmatpush1.bf16.xpose.msra.mxu0 0
    %1179 = vmatprep.subr.bf16.mxu0 0
    %1180 = vmatpush1.bf16.xpose.msra.mxu0 0
    %1181 = vmatprep.subr.bf16.mxu0 0
    %1182 = vmatpush1.bf16.xpose.msra.mxu0 0
    %1183 = vmatprep.subr.bf16.mxu0 0
    %1184 = vmatpush1.bf16.xpose.msra.mxu0 0
    %1185 = vmatprep.subr.bf16.mxu0 0
    %1186 = vmatpush1.bf16.xpose.msra.mxu0 0
    %1187 = vmatprep.subr.bf16.mxu0 0
    %1188 = vmatpush1.bf16.xpose.msra.mxu0 0
    %1189 = vmatprep.subr.bf16.mxu0 0
    %1190 = vmatpush1.bf16.xpose.msra.mxu0 0
    %1191 = vmatprep.subr.bf16.mxu0 0
    %1192 = vmatpush1.bf16.xpose.msra.mxu0 %v1175
    %1193 = vmatprep.subr.bf16.mxu0 0
    %1194 = vmatpush2.bf16.xpose.msra.mxu0 0
    %1195 = vmatprep.subr.bf16.mxu0 0
    %1196 = vmatpush2.bf16.xpose.msra.mxu0 0
    %1197 = vmatprep.subr.bf16.mxu0 0
    %1198 = vmatpush2.bf16.xpose.msra.mxu0 0
    %1199 = vmatprep.subr.bf16.mxu0 0
    %1200 = vmatpush2.bf16.xpose.msra.mxu0 0
    %1201 = vmatprep.subr.bf16.mxu0 0
    %1202 = vmatpush2.bf16.xpose.msra.mxu0 0
    %1203 = vmatprep.subr.bf16.mxu0 0
    %1204 = vmatpush2.bf16.xpose.msra.mxu0 0
    %1205 = vmatprep.subr.bf16.mxu0 0
    %1206 = vmatpush2.bf16.xpose.msra.mxu0 0
    %1207 = vmatprep.subr.bf16.mxu0 0
    %1208 = vmatpush2.bf16.xpose.msra.mxu0 0
    %1209 = vmatprep.mubr.bf16.mxu0 0
    %1210 = vmatmul.mubr.bf16.gmra.mxu0 %v1172
    %v1211 = vpop.f32.mrf.mxu0
    %v1212 = vadd.f32 0.0, %v1211
    %v1213 = vpop.f32.mrf.mxu0
    %v1214 = vpop.f32.mrf.mxu0
    %v1215 = vpop.f32.mrf.mxu0
    %1216 = vdwg.mxu0
    %v1217 = vsel %vm225, %v1212, -inf
    %1218 = vmax.xlane.f32.xlu0 %v1217
    %v1219 = vpop.xlane.xlu0 %1218
    %v1220 = vsub.f32 %v1212, %v1219
    %v1221 = vmul.f32 %v1220, 1.442695
    %v1222 = vpow.pop %v1221
    %v1223 = vsel %vm225, %v1222, 0.0
    %1224 = vadd.xlane.f32.xlu0 %v1223
    %v1225 = vpop.xlane.xlu0 %1224
    %v1226 = vrcp.pop %v1225
    %v1227 = vmul.f32 %v1222, %v1226
    %v1228 = vpack.c.bf16 %v1227, %v1227
    %1229 = vrot.lane.b32.xlu0 %v860, 80
    %v1230 = vpop.permute.xlu0 %1229
    %v1232 = vsel %vm225, %v1228, 0
    %v1235 = vsel %vm290, %v1230, 0
    %1237 = vmatprep.subr.bf16.mxu0 0
    %1238 = vmatpush1.bf16.msra.mxu0 0
    %1239 = vmatprep.subr.bf16.mxu0 0
    %1240 = vmatpush1.bf16.msra.mxu0 0
    %1241 = vmatprep.subr.bf16.mxu0 0
    %1242 = vmatpush1.bf16.msra.mxu0 0
    %1243 = vmatprep.subr.bf16.mxu0 0
    %1244 = vmatpush1.bf16.msra.mxu0 0
    %1245 = vmatprep.subr.bf16.mxu0 0
    %1246 = vmatpush1.bf16.msra.mxu0 0
    %1247 = vmatprep.subr.bf16.mxu0 0
    %1248 = vmatpush1.bf16.msra.mxu0 0
    %1249 = vmatprep.subr.bf16.mxu0 0
    %1250 = vmatpush1.bf16.msra.mxu0 0
    %1251 = vmatprep.subr.bf16.mxu0 0
    %1252 = vmatpush1.bf16.msra.mxu0 %v1235
    %1253 = vmatprep.subr.bf16.mxu0 0
    %1254 = vmatpush2.bf16.msra.mxu0 0
    %1255 = vmatprep.subr.bf16.mxu0 0
    %1256 = vmatpush2.bf16.msra.mxu0 0
    %1257 = vmatprep.subr.bf16.mxu0 0
    %1258 = vmatpush2.bf16.msra.mxu0 0
    %1259 = vmatprep.subr.bf16.mxu0 0
    %1260 = vmatpush2.bf16.msra.mxu0 0
    %1261 = vmatprep.subr.bf16.mxu0 0
    %1262 = vmatpush2.bf16.msra.mxu0 0
    %1263 = vmatprep.subr.bf16.mxu0 0
    %1264 = vmatpush2.bf16.msra.mxu0 0
    %1265 = vmatprep.subr.bf16.mxu0 0
    %1266 = vmatpush2.bf16.msra.mxu0 0
    %1267 = vmatprep.subr.bf16.mxu0 0
    %1268 = vmatpush2.bf16.msra.mxu0 0
    %1269 = vmatprep.mubr.bf16.mxu0 0
    %1270 = vmatmul.mubr.bf16.gmra.mxu0 %v1232
    %v1271 = vpop.f32.mrf.mxu0
    %v1272 = vadd.f32 0.0, %v1271
    %v1273 = vpop.f32.mrf.mxu0
    %v1274 = vpop.f32.mrf.mxu0
    %v1275 = vpop.f32.mrf.mxu0
    %1276 = vdwg.mxu0
    %v1277 = vpack.c.bf16 %v1272, %v1272
    %v1279 = vsel %vm225, %v1277, 0
    %1281 = vmatprep.subr.bf16.mxu0 0
    %1282 = vmatpush1.bf16.msra.mxu0 0
    %1283 = vmatprep.subr.bf16.mxu0 0
    %1284 = vmatpush1.bf16.msra.mxu0 0
    %1285 = vmatprep.subr.bf16.mxu0 0
    %1286 = vmatpush1.bf16.msra.mxu0 0
    %1287 = vmatprep.subr.bf16.mxu0 0
    %1288 = vmatpush1.bf16.msra.mxu0 0
    %1289 = vmatprep.subr.bf16.mxu0 0
    %1290 = vmatpush1.bf16.msra.mxu0 0
    %1291 = vmatprep.subr.bf16.mxu0 0
    %1292 = vmatpush1.bf16.msra.mxu0 0
    %1293 = vmatprep.subr.bf16.mxu0 0
    %1294 = vmatpush1.bf16.msra.mxu0 0
    %1295 = vmatprep.subr.bf16.mxu0 0
    %1296 = vmatpush1.bf16.msra.mxu0 %v656
    %1297 = vmatprep.subr.bf16.mxu0 0
    %1298 = vmatpush2.bf16.msra.mxu0 0
    %1299 = vmatprep.subr.bf16.mxu0 0
    %1300 = vmatpush2.bf16.msra.mxu0 0
    %1301 = vmatprep.subr.bf16.mxu0 0
    %1302 = vmatpush2.bf16.msra.mxu0 0
    %1303 = vmatprep.subr.bf16.mxu0 0
    %1304 = vmatpush2.bf16.msra.mxu0 0
    %1305 = vmatprep.subr.bf16.mxu0 0
    %1306 = vmatpush2.bf16.msra.mxu0 0
    %1307 = vmatprep.subr.bf16.mxu0 0
    %1308 = vmatpush2.bf16.msra.mxu0 0
    %1309 = vmatprep.subr.bf16.mxu0 0
    %1310 = vmatpush2.bf16.msra.mxu0 0
    %1311 = vmatprep.subr.bf16.mxu0 0
    %1312 = vmatpush2.bf16.msra.mxu0 0
    %1313 = vmatprep.mubr.bf16.mxu0 0
    %1314 = vmatmul.mubr.bf16.gmra.mxu0 %v1279
    %v1315 = vpop.f32.mrf.mxu0
    %v1316 = vadd.f32 0.0, %v1315
    %v1317 = vpop.f32.mrf.mxu0
    %v1318 = vpop.f32.mrf.mxu0
    %v1319 = vpop.f32.mrf.mxu0
    %1320 = vdwg.mxu0
    %v1321 = vadd.f32 %v1166, %v1316
    %1322 = vrot.lane.b32.xlu0 %v859, 104
    %v1323 = vpop.permute.xlu0 %1322
    %1324 = vrot.lane.b32.xlu0 %v860, 104
    %v1325 = vpop.permute.xlu0 %1324
    %v1327 = vsel %vm225, %v1323, 0
    %v1330 = vsel %vm225, %v1325, 0
    %1332 = vmatprep.subr.bf16.mxu0 0
    %1333 = vmatpush1.bf16.xpose.msra.mxu0 0
    %1334 = vmatprep.subr.bf16.mxu0 0
    %1335 = vmatpush1.bf16.xpose.msra.mxu0 0
    %1336 = vmatprep.subr.bf16.mxu0 0
    %1337 = vmatpush1.bf16.xpose.msra.mxu0 0
    %1338 = vmatprep.subr.bf16.mxu0 0
    %1339 = vmatpush1.bf16.xpose.msra.mxu0 0
    %1340 = vmatprep.subr.bf16.mxu0 0
    %1341 = vmatpush1.bf16.xpose.msra.mxu0 0
    %1342 = vmatprep.subr.bf16.mxu0 0
    %1343 = vmatpush1.bf16.xpose.msra.mxu0 0
    %1344 = vmatprep.subr.bf16.mxu0 0
    %1345 = vmatpush1.bf16.xpose.msra.mxu0 0
    %1346 = vmatprep.subr.bf16.mxu0 0
    %1347 = vmatpush1.bf16.xpose.msra.mxu0 %v1330
    %1348 = vmatprep.subr.bf16.mxu0 0
    %1349 = vmatpush2.bf16.xpose.msra.mxu0 0
    %1350 = vmatprep.subr.bf16.mxu0 0
    %1351 = vmatpush2.bf16.xpose.msra.mxu0 0
    %1352 = vmatprep.subr.bf16.mxu0 0
    %1353 = vmatpush2.bf16.xpose.msra.mxu0 0
    %1354 = vmatprep.subr.bf16.mxu0 0
    %1355 = vmatpush2.bf16.xpose.msra.mxu0 0
    %1356 = vmatprep.subr.bf16.mxu0 0
    %1357 = vmatpush2.bf16.xpose.msra.mxu0 0
    %1358 = vmatprep.subr.bf16.mxu0 0
    %1359 = vmatpush2.bf16.xpose.msra.mxu0 0
    %1360 = vmatprep.subr.bf16.mxu0 0
    %1361 = vmatpush2.bf16.xpose.msra.mxu0 0
    %1362 = vmatprep.subr.bf16.mxu0 0
    %1363 = vmatpush2.bf16.xpose.msra.mxu0 0
    %1364 = vmatprep.mubr.bf16.mxu0 0
    %1365 = vmatmul.mubr.bf16.gmra.mxu0 %v1327
    %v1366 = vpop.f32.mrf.mxu0
    %v1367 = vadd.f32 0.0, %v1366
    %v1368 = vpop.f32.mrf.mxu0
    %v1369 = vpop.f32.mrf.mxu0
    %v1370 = vpop.f32.mrf.mxu0
    %1371 = vdwg.mxu0
    %v1372 = vsel %vm225, %v1367, -inf
    %1373 = vmax.xlane.f32.xlu0 %v1372
    %v1374 = vpop.xlane.xlu0 %1373
    %v1375 = vsub.f32 %v1367, %v1374
    %v1376 = vmul.f32 %v1375, 1.442695
    %v1377 = vpow.pop %v1376
    %v1378 = vsel %vm225, %v1377, 0.0
    %1379 = vadd.xlane.f32.xlu0 %v1378
    %v1380 = vpop.xlane.xlu0 %1379
    %v1381 = vrcp.pop %v1380
    %v1382 = vmul.f32 %v1377, %v1381
    %v1383 = vpack.c.bf16 %v1382, %v1382
    %1384 = vrot.lane.b32.xlu0 %v860, 72
    %v1385 = vpop.permute.xlu0 %1384
    %v1387 = vsel %vm225, %v1383, 0
    %v1390 = vsel %vm290, %v1385, 0
    %1392 = vmatprep.subr.bf16.mxu0 0
    %1393 = vmatpush1.bf16.msra.mxu0 0
    %1394 = vmatprep.subr.bf16.mxu0 0
    %1395 = vmatpush1.bf16.msra.mxu0 0
    %1396 = vmatprep.subr.bf16.mxu0 0
    %1397 = vmatpush1.bf16.msra.mxu0 0
    %1398 = vmatprep.subr.bf16.mxu0 0
    %1399 = vmatpush1.bf16.msra.mxu0 0
    %1400 = vmatprep.subr.bf16.mxu0 0
    %1401 = vmatpush1.bf16.msra.mxu0 0
    %1402 = vmatprep.subr.bf16.mxu0 0
    %1403 = vmatpush1.bf16.msra.mxu0 0
    %1404 = vmatprep.subr.bf16.mxu0 0
    %1405 = vmatpush1.bf16.msra.mxu0 0
    %1406 = vmatprep.subr.bf16.mxu0 0
    %1407 = vmatpush1.bf16.msra.mxu0 %v1390
    %1408 = vmatprep.subr.bf16.mxu0 0
    %1409 = vmatpush2.bf16.msra.mxu0 0
    %1410 = vmatprep.subr.bf16.mxu0 0
    %1411 = vmatpush2.bf16.msra.mxu0 0
    %1412 = vmatprep.subr.bf16.mxu0 0
    %1413 = vmatpush2.bf16.msra.mxu0 0
    %1414 = vmatprep.subr.bf16.mxu0 0
    %1415 = vmatpush2.bf16.msra.mxu0 0
    %1416 = vmatprep.subr.bf16.mxu0 0
    %1417 = vmatpush2.bf16.msra.mxu0 0
    %1418 = vmatprep.subr.bf16.mxu0 0
    %1419 = vmatpush2.bf16.msra.mxu0 0
    %1420 = vmatprep.subr.bf16.mxu0 0
    %1421 = vmatpush2.bf16.msra.mxu0 0
    %1422 = vmatprep.subr.bf16.mxu0 0
    %1423 = vmatpush2.bf16.msra.mxu0 0
    %1424 = vmatprep.mubr.bf16.mxu0 0
    %1425 = vmatmul.mubr.bf16.gmra.mxu0 %v1387
    %v1426 = vpop.f32.mrf.mxu0
    %v1427 = vadd.f32 0.0, %v1426
    %v1428 = vpop.f32.mrf.mxu0
    %v1429 = vpop.f32.mrf.mxu0
    %v1430 = vpop.f32.mrf.mxu0
    %1431 = vdwg.mxu0
    %v1432 = vpack.c.bf16 %v1427, %v1427
    %v1434 = vsel %vm225, %v1432, 0
    %1436 = vmatprep.subr.bf16.mxu0 0
    %1437 = vmatpush1.bf16.msra.mxu0 0
    %1438 = vmatprep.subr.bf16.mxu0 0
    %1439 = vmatpush1.bf16.msra.mxu0 0
    %1440 = vmatprep.subr.bf16.mxu0 0
    %1441 = vmatpush1.bf16.msra.mxu0 0
    %1442 = vmatprep.subr.bf16.mxu0 0
    %1443 = vmatpush1.bf16.msra.mxu0 0
    %1444 = vmatprep.subr.bf16.mxu0 0
    %1445 = vmatpush1.bf16.msra.mxu0 0
    %1446 = vmatprep.subr.bf16.mxu0 0
    %1447 = vmatpush1.bf16.msra.mxu0 0
    %1448 = vmatprep.subr.bf16.mxu0 0
    %1449 = vmatpush1.bf16.msra.mxu0 0
    %1450 = vmatprep.subr.bf16.mxu0 0
    %1451 = vmatpush1.bf16.msra.mxu0 %v814
    %1452 = vmatprep.subr.bf16.mxu0 0
    %1453 = vmatpush2.bf16.msra.mxu0 0
    %1454 = vmatprep.subr.bf16.mxu0 0
    %1455 = vmatpush2.bf16.msra.mxu0 0
    %1456 = vmatprep.subr.bf16.mxu0 0
    %1457 = vmatpush2.bf16.msra.mxu0 0
    %1458 = vmatprep.subr.bf16.mxu0 0
    %1459 = vmatpush2.bf16.msra.mxu0 0
    %1460 = vmatprep.subr.bf16.mxu0 0
    %1461 = vmatpush2.bf16.msra.mxu0 0
    %1462 = vmatprep.subr.bf16.mxu0 0
    %1463 = vmatpush2.bf16.msra.mxu0 0
    %1464 = vmatprep.subr.bf16.mxu0 0
    %1465 = vmatpush2.bf16.msra.mxu0 0
    %1466 = vmatprep.subr.bf16.mxu0 0
    %1467 = vmatpush2.bf16.msra.mxu0 0
    %1468 = vmatprep.mubr.bf16.mxu0 0
    %1469 = vmatmul.mubr.bf16.gmra.mxu0 %v1434
    %v1470 = vpop.f32.mrf.mxu0
    %v1471 = vadd.f32 0.0, %v1470
    %v1472 = vpop.f32.mrf.mxu0
    %v1473 = vpop.f32.mrf.mxu0
    %v1474 = vpop.f32.mrf.mxu0
    %1475 = vdwg.mxu0
    %v1476 = vadd.f32 %v1321, %v1471
    %1477 = vst.msk [vmem:[#allocation2 + $0x8] sm:$0xff] %vm857, %v1476
    // Predicated region
    $region14: #{_lambda_.1} parent=1 // pred_check
      _
    $region15: #{_lambda_.1} parent=1 // pred_check_branch
      %1479 = sbr.rel (0) target = $region17
    $region16: #{_lambda_.1} parent=1 // pred_region
      %s1481 = ssub.s32 256, 256
      %1482 = vsyncadd [#allocation3], %s1481
      %s1483 = sshll.u32 [#allocation2], 4
      %s1484 = int_to_ptr.vmem [resolvable:$true] %s1483
      %1489 = dma.vmem_to_hbm [thread:$0]  %s1484, 256, %s3, [#allocation3], 128, 128, 8
    $region17: #{_lambda_.1} parent=1 // pred_fallthru
      _
    // Predicated region
    $region18: #{_lambda_.1} parent=1 // pred_check
      _
    $region19: #{_lambda_.1} parent=1 // pred_check_branch
      %1491 = sbr.rel (0) target = $region21
    $region20: #{_lambda_.1} parent=1 // pred_region
      %1492 = dma.done [#allocation3], 256
    $region21: #{_lambda_.1} parent=1 // pred_fallthru
      _
    %1493 = vsyncpa [#allocation3], 1

</llo_original>
